<compile_context>
chip_gen: v5e
topology: v5e:2x2
jax: 0.10.0
libtpu: 0.0.40
codegen_flags: <defaults>
</compile_context>

<pallas_src>
import math
import jax
import jax.numpy as jnp
from jax.experimental import pallas as pl
from jax.experimental.pallas import tpu as pltpu


def _round_up(a, m):
    return ((a + m - 1) // m) * m


# ----------------------------- kernel -----------------------------

def _make_siren_kernel(num_sine_layers, w0_initial, w0, dim_in):
    """Pallas kernel body for the full SIREN MLP in transposed orientation.

    Ref order: (x_ref, W0, b0, W1, b1, ..., W_last, b_last, out_ref)
      x_ref : (dim_in, tile_n)          rows on lanes, features on sublanes
      W_l   : (out_l, in_l)             b_l : (out_l, 1)
      out   : (dim_out, tile_n)
    """
    n_linear = num_sine_layers + 1  # hidden sine layers + final identity layer

    def kernel(*refs):
        x_ref = refs[0]
        o_ref = refs[-1]
        prm = refs[1:-1]

        x = x_ref[...].astype(jnp.float32)                  # (dim_in, tile_n)

        # ---- layer 0: tiny contraction -> VPU broadcast FMAs, not the MXU ----
        W = prm[0][...].astype(jnp.float32)                 # (out0, dim_in)
        b = prm[1][...].astype(jnp.float32)                 # (out0, 1)
        if dim_in <= 8:
            h = b + W[:, 0:1] * x[0:1, :]                   # (out0, tile_n)
            for k in range(1, dim_in):
                h = h + W[:, k:k + 1] * x[k:k + 1, :]
        else:
            h = jnp.dot(W, x, preferred_element_type=jnp.float32) + b
        if num_sine_layers > 0:
            h = jnp.sin(w0_initial * h)

        # ---- remaining layers: lane-dense MXU matmuls (out, hid) @ (hid, tile_n) ----
        for li in range(1, n_linear):
            Wl = prm[2 * li][...].astype(jnp.float32)
            bl = prm[2 * li + 1][...].astype(jnp.float32)
            h = jnp.dot(Wl, h, preferred_element_type=jnp.float32) + bl
            if li < num_sine_layers:
                h = jnp.sin(w0 * h)

        o_ref[...] = h.astype(o_ref.dtype)

    return kernel


# ----------------------------- wrapper -----------------------------

def modulator_nonlinear_forward(x, params, *, w0_initial=30.0, w0=30.0, tile_n=1024):
    """Apply the SIREN modulator to x of shape (N, dim_in).

    params: list of (W, b) pairs; W is (out, in), b is (out, 1).
    Returns (N, dim_out), matching the PyTorch module's interface.
    """
    N, dim_in = x.shape
    assert params[0][0].shape[1] == dim_in
    dim_out = params[-1][0].shape[0]
    num_sine_layers = len(params) - 1

    # Row tile: multiple of 128 lanes; cap so the grid has >= 2 steps when N allows
    # (lets the parallel grid axis shard across both TensorCores on v7x).
    cap = max(128, _round_up(pl.cdiv(N, 2), 128))
    tile = max(128, min(_round_up(int(tile_n), 128), cap))
    grid_n = pl.cdiv(N, tile)
    n_pad = grid_n * tile

    # Lane-dense transposed input: (dim_in, n_pad). Padded coordinates are zeros;
    # their outputs are computed but sliced off below.
    x_t = jnp.pad(x.T, ((0, 0), (0, n_pad - N)))

    kernel = _make_siren_kernel(num_sine_layers, float(w0_initial), float(w0), dim_in)

    in_specs = [pl.BlockSpec((dim_in, tile), lambda i: (0, i))]
    flat_params = []
    for (W, b) in params:
        # Full-extent, grid-invariant blocks: stay resident in VMEM across all steps.
        in_specs.append(pl.BlockSpec(W.shape, lambda i: (0, 0)))
        in_specs.append(pl.BlockSpec(b.shape, lambda i: (0, 0)))
        flat_params.extend([W, b])

    out_t = pl.pallas_call(
        kernel,
        out_shape=jax.ShapeDtypeStruct((dim_out, n_pad), x.dtype),
        grid=(grid_n,),
        in_specs=in_specs,
        out_specs=pl.BlockSpec((dim_out, tile), lambda i: (0, i)),
        compiler_params=pltpu.CompilerParams(
            dimension_semantics=("parallel",),
        ),
    )(x_t, *flat_params)

    # Transpose back to the module's external (N, dim_out) layout.
    return out_t[:, :N].T


# ----------------------------- param init -----------------------------

def init_siren_params(key, dim_in, dim_out, mod_layers=3, mod_hidden=32,
                      w0=30.0, c=6.0, dtype=jnp.float32):
    """Deterministic SIREN initialization (lucidrains-style).

    First layer: U(-1/dim_in, 1/dim_in); later layers: U(-sqrt(c/fan_in)/w0, ...).
    Returns list of (W, b) with W shape (out, in), b shape (out, 1).
    """
    dims = [dim_in] + [mod_hidden] * mod_layers + [dim_out]
    params = []
    for li in range(len(dims) - 1):
        fan_in, fan_out = dims[li], dims[li + 1]
        key, kw, kb = jax.random.split(key, 3)
        bound = (1.0 / fan_in) if li == 0 else (math.sqrt(c / fan_in) / w0)
        W = jax.random.uniform(kw, (fan_out, fan_in), dtype, minval=-bound, maxval=bound)
        b = jax.random.uniform(kb, (fan_out, 1), dtype, minval=-bound, maxval=bound)
        params.append((W, b))
    return params


# ----------------------------- reference (pure JAX) -----------------------------

def siren_reference(x, params, w0_initial=30.0, w0=30.0):
    h = x.astype(jnp.float32)
    n_sine = len(params) - 1
    for li, (W, b) in enumerate(params):
        h = jnp.dot(h, W.T.astype(jnp.float32),
                    precision=jax.lax.Precision.HIGHEST) + b.T.astype(jnp.float32)
        if li < n_sine:
            freq = w0_initial if li == 0 else w0
            h = jnp.sin(freq * h)
    return h.astype(x.dtype)


# ----------------------------- main -----------------------------

if __name__ == "__main__":
    key = jax.random.PRNGKey(0)

    # Modulator_nonlinear(dim_in=2, dim_out=32, mod_layers=3, mod_hidden=32, w0=30.)
    dim_in, dim_out = 2, 32
    mod_layers, mod_hidden = 3, 32
    w0 = 30.0

    key, k_params, k_x = jax.random.split(key, 3)
    params = init_siren_params(k_params, dim_in, dim_out,
                               mod_layers=mod_layers, mod_hidden=mod_hidden, w0=w0)

    # Batch of 256 input coordinates in [-1, 1], shape (N, dim_in).
    N = 256
    x = jax.random.uniform(k_x, (N, dim_in), jnp.float32, minval=-1.0, maxval=1.0)

    out = modulator_nonlinear_forward(x, params, w0_initial=w0, w0=w0, tile_n=1024)
    out = jax.block_until_ready(out)

    ref = siren_reference(x, params, w0_initial=w0, w0=w0)
    assert out.shape == (N, dim_out), out.shape
    # sin(30*h) amplifies matmul rounding differences; 5e-5 still catches any real
    # layout/semantics bug (those produce O(1e-2)+ errors).
    assert jnp.allclose(out, ref, atol=5e-5, rtol=5e-5), "mismatch vs pure-JAX reference"

    print("KERNEL_OK")
</pallas_src>

<mosaic_0001>
module attributes {stable_mosaic.version = 11 : i64} {
  func.func @kernel(%arg0: i32, %arg1: memref<2x128xf32, #tpu.memory_space<vmem>>, %arg2: memref<32x2xf32, #tpu.memory_space<vmem>>, %arg3: memref<32x1xf32, #tpu.memory_space<vmem>>, %arg4: memref<32x32xf32, #tpu.memory_space<vmem>>, %arg5: memref<32x1xf32, #tpu.memory_space<vmem>>, %arg6: memref<32x32xf32, #tpu.memory_space<vmem>>, %arg7: memref<32x1xf32, #tpu.memory_space<vmem>>, %arg8: memref<32x32xf32, #tpu.memory_space<vmem>>, %arg9: memref<32x1xf32, #tpu.memory_space<vmem>>, %arg10: memref<32x128xf32, #tpu.memory_space<vmem>>) attributes {dimension_semantics = [#tpu.dimension_semantics<parallel>], iteration_bounds = array<i64: 2>, scalar_prefetch = 0 : i64, scratch_operands = 0 : i64, tpu.core_type = #tpu.core_type<tc>, window_params = [{transform_indices = @transform_0, window_bounds = array<i64: 2, 128>}, {pipeline_mode = #tpu.pipeline_mode<synchronous>, transform_indices = @transform_1, window_bounds = array<i64: 32, 2>}, {pipeline_mode = #tpu.pipeline_mode<synchronous>, transform_indices = @transform_2, window_bounds = array<i64: 32, 1>}, {pipeline_mode = #tpu.pipeline_mode<synchronous>, transform_indices = @transform_3, window_bounds = array<i64: 32, 32>}, {pipeline_mode = #tpu.pipeline_mode<synchronous>, transform_indices = @transform_4, window_bounds = array<i64: 32, 1>}, {pipeline_mode = #tpu.pipeline_mode<synchronous>, transform_indices = @transform_5, window_bounds = array<i64: 32, 32>}, {pipeline_mode = #tpu.pipeline_mode<synchronous>, transform_indices = @transform_6, window_bounds = array<i64: 32, 1>}, {pipeline_mode = #tpu.pipeline_mode<synchronous>, transform_indices = @transform_7, window_bounds = array<i64: 32, 32>}, {pipeline_mode = #tpu.pipeline_mode<synchronous>, transform_indices = @transform_8, window_bounds = array<i64: 32, 1>}, {transform_indices = @transform_9, window_bounds = array<i64: 32, 128>}]} {
    %c0 = arith.constant 0 : index
    %c0_0 = arith.constant 0 : index
    %0 = vector.load %arg1[%c0, %c0_0] : memref<2x128xf32, #tpu.memory_space<vmem>>, vector<2x128xf32>
    %c0_1 = arith.constant 0 : index
    %c0_2 = arith.constant 0 : index
    %1 = vector.load %arg2[%c0_1, %c0_2] : memref<32x2xf32, #tpu.memory_space<vmem>>, vector<32x2xf32>
    %c0_3 = arith.constant 0 : index
    %c0_4 = arith.constant 0 : index
    %2 = vector.load %arg3[%c0_3, %c0_4] : memref<32x1xf32, #tpu.memory_space<vmem>>, vector<32x1xf32>
    %3 = vector.extract_strided_slice %1 {offsets = [0, 0], sizes = [32, 1], strides = [1, 1]} : vector<32x2xf32> to vector<32x1xf32>
    %4 = vector.extract_strided_slice %0 {offsets = [0, 0], sizes = [1, 128], strides = [1, 1]} : vector<2x128xf32> to vector<1x128xf32>
    %5 = vector.broadcast %3 : vector<32x1xf32> to vector<32x128xf32>
    %6 = vector.broadcast %4 : vector<1x128xf32> to vector<32x128xf32>
    %7 = arith.mulf %5, %6 : vector<32x128xf32>
    %8 = vector.broadcast %2 : vector<32x1xf32> to vector<32x128xf32>
    %9 = arith.addf %8, %7 : vector<32x128xf32>
    %10 = vector.extract_strided_slice %1 {offsets = [0, 1], sizes = [32, 1], strides = [1, 1]} : vector<32x2xf32> to vector<32x1xf32>
    %11 = vector.extract_strided_slice %0 {offsets = [1, 0], sizes = [1, 128], strides = [1, 1]} : vector<2x128xf32> to vector<1x128xf32>
    %12 = vector.broadcast %10 : vector<32x1xf32> to vector<32x128xf32>
    %13 = vector.broadcast %11 : vector<1x128xf32> to vector<32x128xf32>
    %14 = arith.mulf %12, %13 : vector<32x128xf32>
    %15 = arith.addf %9, %14 : vector<32x128xf32>
    %cst = arith.constant 3.000000e+01 : f32
    %16 = vector.broadcast %cst : f32 to vector<32x128xf32>
    %17 = arith.mulf %16, %15 : vector<32x128xf32>
    %18 = math.sin %17 : vector<32x128xf32>
    %c0_5 = arith.constant 0 : index
    %c0_6 = arith.constant 0 : index
    %19 = vector.load %arg4[%c0_5, %c0_6] : memref<32x32xf32, #tpu.memory_space<vmem>>, vector<32x32xf32>
    %c0_7 = arith.constant 0 : index
    %c0_8 = arith.constant 0 : index
    %20 = vector.load %arg5[%c0_7, %c0_8] : memref<32x1xf32, #tpu.memory_space<vmem>>, vector<32x1xf32>
    %cst_9 = arith.constant dense<0.000000e+00> : vector<32x128xf32>
    %21 = tpu.matmul %19, %18, %cst_9 {dimension_numbers = #tpu.dot_dimension_numbers<[1], [0], [0], [1], [0, 0, 1, 1], [], []>} : vector<32x32xf32>, vector<32x128xf32>, vector<32x128xf32> -> vector<32x128xf32>
    %22 = vector.broadcast %20 : vector<32x1xf32> to vector<32x128xf32>
    %23 = arith.addf %21, %22 : vector<32x128xf32>
    %cst_10 = arith.constant 3.000000e+01 : f32
    %24 = vector.broadcast %cst_10 : f32 to vector<32x128xf32>
    %25 = arith.mulf %24, %23 : vector<32x128xf32>
    %26 = math.sin %25 : vector<32x128xf32>
    %c0_11 = arith.constant 0 : index
    %c0_12 = arith.constant 0 : index
    %27 = vector.load %arg6[%c0_11, %c0_12] : memref<32x32xf32, #tpu.memory_space<vmem>>, vector<32x32xf32>
    %c0_13 = arith.constant 0 : index
    %c0_14 = arith.constant 0 : index
    %28 = vector.load %arg7[%c0_13, %c0_14] : memref<32x1xf32, #tpu.memory_space<vmem>>, vector<32x1xf32>
    %cst_15 = arith.constant dense<0.000000e+00> : vector<32x128xf32>
    %29 = tpu.matmul %27, %26, %cst_15 {dimension_numbers = #tpu.dot_dimension_numbers<[1], [0], [0], [1], [0, 0, 1, 1], [], []>} : vector<32x32xf32>, vector<32x128xf32>, vector<32x128xf32> -> vector<32x128xf32>
    %30 = vector.broadcast %28 : vector<32x1xf32> to vector<32x128xf32>
    %31 = arith.addf %29, %30 : vector<32x128xf32>
    %cst_16 = arith.constant 3.000000e+01 : f32
    %32 = vector.broadcast %cst_16 : f32 to vector<32x128xf32>
    %33 = arith.mulf %32, %31 : vector<32x128xf32>
    %34 = math.sin %33 : vector<32x128xf32>
    %c0_17 = arith.constant 0 : index
    %c0_18 = arith.constant 0 : index
    %35 = vector.load %arg8[%c0_17, %c0_18] : memref<32x32xf32, #tpu.memory_space<vmem>>, vector<32x32xf32>
    %c0_19 = arith.constant 0 : index
    %c0_20 = arith.constant 0 : index
    %36 = vector.load %arg9[%c0_19, %c0_20] : memref<32x1xf32, #tpu.memory_space<vmem>>, vector<32x1xf32>
    %cst_21 = arith.constant dense<0.000000e+00> : vector<32x128xf32>
    %37 = tpu.matmul %35, %34, %cst_21 {dimension_numbers = #tpu.dot_dimension_numbers<[1], [0], [0], [1], [0, 0, 1, 1], [], []>} : vector<32x32xf32>, vector<32x128xf32>, vector<32x128xf32> -> vector<32x128xf32>
    %38 = vector.broadcast %36 : vector<32x1xf32> to vector<32x128xf32>
    %39 = arith.addf %37, %38 : vector<32x128xf32>
    %c0_22 = arith.constant 0 : index
    %c0_23 = arith.constant 0 : index
    %40 = vector.load %arg10[%c0_22, %c0_23] : memref<32x128xf32, #tpu.memory_space<vmem>>, vector<32x128xf32>
    tpu.vector_store %arg10[%c0_22, %c0_23], %39 {strides = array<i32>} : memref<32x128xf32, #tpu.memory_space<vmem>>, vector<32x128xf32>,
    return
  }
  func.func @transform_0(%arg0: i32) -> (i32, i32) {
    %c0_i32 = arith.constant 0 : i32
    %c0_i32_0 = arith.constant 0 : i32
    return %c0_i32, %arg0 : i32, i32
  }
  func.func @transform_1(%arg0: i32) -> (i32, i32) {
    %c0_i32 = arith.constant 0 : i32
    %c0_i32_0 = arith.constant 0 : i32
    %c0_i32_1 = arith.constant 0 : i32
    return %c0_i32, %c0_i32_0 : i32, i32
  }
  func.func @transform_2(%arg0: i32) -> (i32, i32) {
    %c0_i32 = arith.constant 0 : i32
    %c0_i32_0 = arith.constant 0 : i32
    %c0_i32_1 = arith.constant 0 : i32
    return %c0_i32, %c0_i32_0 : i32, i32
  }
  func.func @transform_3(%arg0: i32) -> (i32, i32) {
    %c0_i32 = arith.constant 0 : i32
    %c0_i32_0 = arith.constant 0 : i32
    %c0_i32_1 = arith.constant 0 : i32
    return %c0_i32, %c0_i32_0 : i32, i32
  }
  func.func @transform_4(%arg0: i32) -> (i32, i32) {
    %c0_i32 = arith.constant 0 : i32
    %c0_i32_0 = arith.constant 0 : i32
    %c0_i32_1 = arith.constant 0 : i32
    return %c0_i32, %c0_i32_0 : i32, i32
  }
  func.func @transform_5(%arg0: i32) -> (i32, i32) {
    %c0_i32 = arith.constant 0 : i32
    %c0_i32_0 = arith.constant 0 : i32
    %c0_i32_1 = arith.constant 0 : i32
    return %c0_i32, %c0_i32_0 : i32, i32
  }
  func.func @transform_6(%arg0: i32) -> (i32, i32) {
    %c0_i32 = arith.constant 0 : i32
    %c0_i32_0 = arith.constant 0 : i32
    %c0_i32_1 = arith.constant 0 : i32
    return %c0_i32, %c0_i32_0 : i32, i32
  }
  func.func @transform_7(%arg0: i32) -> (i32, i32) {
    %c0_i32 = arith.constant 0 : i32
    %c0_i32_0 = arith.constant 0 : i32
    %c0_i32_1 = arith.constant 0 : i32
    return %c0_i32, %c0_i32_0 : i32, i32
  }
  func.func @transform_8(%arg0: i32) -> (i32, i32) {
    %c0_i32 = arith.constant 0 : i32
    %c0_i32_0 = arith.constant 0 : i32
    %c0_i32_1 = arith.constant 0 : i32
    return %c0_i32, %c0_i32_0 : i32, i32
  }
  func.func @transform_9(%arg0: i32) -> (i32, i32) {
    %c0_i32 = arith.constant 0 : i32
    %c0_i32_0 = arith.constant 0 : i32
    return %c0_i32, %arg0 : i32, i32
  }
}

</mosaic_0001>

<llo_original>
// kernel: tpu_custom_call.1
$region0: #{tpu_custom_call.1}
  #allocation0 [shape = 'u32[]', space=smem, size = 0x4, offset = 0x4, fixed_abs, tag = 'smem constant byte address 0x4 - core index']
  #allocation1 [shape = 'u32[72,128]{1,0:T(1,128)}', space=vmem, size = 0x9000, scoped, tag = 'internal scratch']
  %s0 = inlined_call_operand.vmem [shape: f32[2,256], index: 0, kind: input, shape index: {}]
  %s1 = inlined_call_operand.vmem [shape: f32[32,2], index: 1, kind: input, shape index: {}]
  %s2 = inlined_call_operand.vmem [shape: f32[32,1], index: 2, kind: input, shape index: {}]
  %s3 = inlined_call_operand.vmem [shape: f32[32,32], index: 3, kind: input, shape index: {}]
  %s4 = inlined_call_operand.vmem [shape: f32[32,1], index: 4, kind: input, shape index: {}]
  %s5 = inlined_call_operand.vmem [shape: f32[32,32], index: 5, kind: input, shape index: {}]
  %s6 = inlined_call_operand.vmem [shape: f32[32,1], index: 6, kind: input, shape index: {}]
  %s7 = inlined_call_operand.vmem [shape: f32[32,32], index: 7, kind: input, shape index: {}]
  %s8 = inlined_call_operand.vmem [shape: f32[32,1], index: 8, kind: input, shape index: {}]
  %s9 = inlined_call_operand.hbm [shape: f32[32,256], index: 9, kind: output, shape index: {}]
  %s10 = sld [smem:[#allocation0]]
  $region69: #{tpu_custom_call.1} parent=0
    _
  %s12 = ssub.s32 1, %s10
  %s13 = scalar_select 0, %s12, %s10
  $region1: #{tpu_custom_call.1} parent=0
    #allocation2 [shape = 'u8[32768]{0}', space=vmem, size = 0x8000, scoped, tag = 'output window, operand 0']
    #allocation3 [shape = 's32[2]{0}', space=sflag, size = 0x8, scoped, tag = 'scoped memory for tpu_custom_call.1']
    %14 = vsyncpa [#allocation3], 0
    %s15 = scalar_lea.sflag [#allocation3], 1
    %16 = vsyncpa %s15, 0
    loop: start=0, step=1, limit=4
    $region2: #{tpu_custom_call.1} parent=1 // loop_pre_header
      _
    $region3: #{tpu_custom_call.1} parent=1 // loop_header
      %s18 = sphi 0, %s22
      %p19 = scmp.ge.s32.totalorder %s18, 4
      %s28 = sphi 0, %s30
      %s31 = sphi 0, %s28
      %s32 = sphi 0, %s31
      %s48 = sphi 0, %s32
      %s52 = sphi 0, %s52
      %s54 = sphi 0, %s52
      %s55 = sphi 0, %s54
      %s69 = sphi 0, %s55
      %s73 = sphi 0, %s73
      %s75 = sphi 0, %s73
      %s76 = sphi 0, %s75
      %s90 = sphi 0, %s76
      %s94 = sphi 0, %s94
      %s96 = sphi 0, %s94
      %s97 = sphi 0, %s96
      %s111 = sphi 0, %s97
      %s115 = sphi 0, %s115
      %s117 = sphi 0, %s115
      %s118 = sphi 0, %s117
      %s132 = sphi 0, %s118
      %s136 = sphi 0, %s136
      %s138 = sphi 0, %s136
      %s139 = sphi 0, %s138
      %s153 = sphi 0, %s139
      %s157 = sphi 0, %s157
      %s159 = sphi 0, %s157
      %s160 = sphi 0, %s159
      %s174 = sphi 0, %s160
      %s178 = sphi 0, %s178
      %s180 = sphi 0, %s178
      %s181 = sphi 0, %s180
      %s195 = sphi 0, %s181
      %s199 = sphi 0, %s199
      %s201 = sphi 0, %s199
      %s202 = sphi 0, %s201
      %s216 = sphi 0, %s202
      %s222 = sphi 0, %s224
      %s225 = sphi 0, %s222
      %s226 = sphi 0, %s225
      %s242 = sphi 0, %s226
    $region4: #{tpu_custom_call.1} parent=1 // loop_header_branch
      %21 = sbr.rel (%p19) target = $region8
    $region5: #{tpu_custom_call.1} parent=1 // loop_body
      %s23 = ssub.s32 %s18, 1
      %s24 = ssub.s32 %s18, 2
      %s25 = sadd.s32 %s18, 1
      %s26 = ssub.s32 %s18, %s25
      %p27 = scmp.eq.s32.totalorder %s26, 0
      %s29 = sadd.s32 %s28, 1
      %s30 = scalar_select %p27, %s28, %s29
      %p33 = pneg %p27
      %p34 = scmp.eq.s32.totalorder %s18, 1
      %p35 = por %p33, %p34
      %p36 = scmp.ne.s32.totalorder %s28, %s31
      %p37 = scmp.eq.s32.totalorder %s18, 0
      %p38 = por %p36, %p37
      %p39 = scmp.ne.s32.totalorder %s28, %s31
      %p40 = scmp.eq.s32.totalorder %s23, 1
      %p41 = por %p39, %p40
      %p42 = scmp.ne.s32.totalorder %s31, %s32
      %p43 = scmp.eq.s32.totalorder %s23, 0
      %p44 = por %p42, %p43
      %p45 = scmp.ne.s32.totalorder %s31, %s32
      %p46 = scmp.eq.s32.totalorder %s24, 1
      %p47 = por %p45, %p46
      %p49 = scmp.ne.s32.totalorder %s32, %s48
      %p50 = scmp.eq.s32.totalorder %s24, 0
      %p51 = por %p49, %p50
      %s53 = sadd.s32 %s52, 1
      %p56 = scmp.eq.s32.totalorder %s18, 1
      %p57 = scmp.ne.s32.totalorder %s52, %s54
      %p58 = scmp.eq.s32.totalorder %s18, 0
      %p59 = por %p57, %p58
      %p60 = scmp.ne.s32.totalorder %s52, %s54
      %p61 = scmp.eq.s32.totalorder %s23, 1
      %p62 = por %p60, %p61
      %p63 = scmp.ne.s32.totalorder %s54, %s55
      %p64 = scmp.eq.s32.totalorder %s23, 0
      %p65 = por %p63, %p64
      %p66 = scmp.ne.s32.totalorder %s54, %s55
      %p67 = scmp.eq.s32.totalorder %s24, 1
      %p68 = por %p66, %p67
      %p70 = scmp.ne.s32.totalorder %s55, %s69
      %p71 = scmp.eq.s32.totalorder %s24, 0
      %p72 = por %p70, %p71
      %s74 = sadd.s32 %s73, 1
      %p77 = scmp.eq.s32.totalorder %s18, 1
      %p78 = scmp.ne.s32.totalorder %s73, %s75
      %p79 = scmp.eq.s32.totalorder %s18, 0
      %p80 = por %p78, %p79
      %p81 = scmp.ne.s32.totalorder %s73, %s75
      %p82 = scmp.eq.s32.totalorder %s23, 1
      %p83 = por %p81, %p82
      %p84 = scmp.ne.s32.totalorder %s75, %s76
      %p85 = scmp.eq.s32.totalorder %s23, 0
      %p86 = por %p84, %p85
      %p87 = scmp.ne.s32.totalorder %s75, %s76
      %p88 = scmp.eq.s32.totalorder %s24, 1
      %p89 = por %p87, %p88
      %p91 = scmp.ne.s32.totalorder %s76, %s90
      %p92 = scmp.eq.s32.totalorder %s24, 0
      %p93 = por %p91, %p92
      %s95 = sadd.s32 %s94, 1
      %p98 = scmp.eq.s32.totalorder %s18, 1
      %p99 = scmp.ne.s32.totalorder %s94, %s96
      %p100 = scmp.eq.s32.totalorder %s18, 0
      %p101 = por %p99, %p100
      %p102 = scmp.ne.s32.totalorder %s94, %s96
      %p103 = scmp.eq.s32.totalorder %s23, 1
      %p104 = por %p102, %p103
      %p105 = scmp.ne.s32.totalorder %s96, %s97
      %p106 = scmp.eq.s32.totalorder %s23, 0
      %p107 = por %p105, %p106
      %p108 = scmp.ne.s32.totalorder %s96, %s97
      %p109 = scmp.eq.s32.totalorder %s24, 1
      %p110 = por %p108, %p109
      %p112 = scmp.ne.s32.totalorder %s97, %s111
      %p113 = scmp.eq.s32.totalorder %s24, 0
      %p114 = por %p112, %p113
      %s116 = sadd.s32 %s115, 1
      %p119 = scmp.eq.s32.totalorder %s18, 1
      %p120 = scmp.ne.s32.totalorder %s115, %s117
      %p121 = scmp.eq.s32.totalorder %s18, 0
      %p122 = por %p120, %p121
      %p123 = scmp.ne.s32.totalorder %s115, %s117
      %p124 = scmp.eq.s32.totalorder %s23, 1
      %p125 = por %p123, %p124
      %p126 = scmp.ne.s32.totalorder %s117, %s118
      %p127 = scmp.eq.s32.totalorder %s23, 0
      %p128 = por %p126, %p127
      %p129 = scmp.ne.s32.totalorder %s117, %s118
      %p130 = scmp.eq.s32.totalorder %s24, 1
      %p131 = por %p129, %p130
      %p133 = scmp.ne.s32.totalorder %s118, %s132
      %p134 = scmp.eq.s32.totalorder %s24, 0
      %p135 = por %p133, %p134
      %s137 = sadd.s32 %s136, 1
      %p140 = scmp.eq.s32.totalorder %s18, 1
      %p141 = scmp.ne.s32.totalorder %s136, %s138
      %p142 = scmp.eq.s32.totalorder %s18, 0
      %p143 = por %p141, %p142
      %p144 = scmp.ne.s32.totalorder %s136, %s138
      %p145 = scmp.eq.s32.totalorder %s23, 1
      %p146 = por %p144, %p145
      %p147 = scmp.ne.s32.totalorder %s138, %s139
      %p148 = scmp.eq.s32.totalorder %s23, 0
      %p149 = por %p147, %p148
      %p150 = scmp.ne.s32.totalorder %s138, %s139
      %p151 = scmp.eq.s32.totalorder %s24, 1
      %p152 = por %p150, %p151
      %p154 = scmp.ne.s32.totalorder %s139, %s153
      %p155 = scmp.eq.s32.totalorder %s24, 0
      %p156 = por %p154, %p155
      %s158 = sadd.s32 %s157, 1
      %p161 = scmp.eq.s32.totalorder %s18, 1
      %p162 = scmp.ne.s32.totalorder %s157, %s159
      %p163 = scmp.eq.s32.totalorder %s18, 0
      %p164 = por %p162, %p163
      %p165 = scmp.ne.s32.totalorder %s157, %s159
      %p166 = scmp.eq.s32.totalorder %s23, 1
      %p167 = por %p165, %p166
      %p168 = scmp.ne.s32.totalorder %s159, %s160
      %p169 = scmp.eq.s32.totalorder %s23, 0
      %p170 = por %p168, %p169
      %p171 = scmp.ne.s32.totalorder %s159, %s160
      %p172 = scmp.eq.s32.totalorder %s24, 1
      %p173 = por %p171, %p172
      %p175 = scmp.ne.s32.totalorder %s160, %s174
      %p176 = scmp.eq.s32.totalorder %s24, 0
      %p177 = por %p175, %p176
      %s179 = sadd.s32 %s178, 1
      %p182 = scmp.eq.s32.totalorder %s18, 1
      %p183 = scmp.ne.s32.totalorder %s178, %s180
      %p184 = scmp.eq.s32.totalorder %s18, 0
      %p185 = por %p183, %p184
      %p186 = scmp.ne.s32.totalorder %s178, %s180
      %p187 = scmp.eq.s32.totalorder %s23, 1
      %p188 = por %p186, %p187
      %p189 = scmp.ne.s32.totalorder %s180, %s181
      %p190 = scmp.eq.s32.totalorder %s23, 0
      %p191 = por %p189, %p190
      %p192 = scmp.ne.s32.totalorder %s180, %s181
      %p193 = scmp.eq.s32.totalorder %s24, 1
      %p194 = por %p192, %p193
      %p196 = scmp.ne.s32.totalorder %s181, %s195
      %p197 = scmp.eq.s32.totalorder %s24, 0
      %p198 = por %p196, %p197
      %s200 = sadd.s32 %s199, 1
      %p203 = scmp.eq.s32.totalorder %s18, 1
      %p204 = scmp.ne.s32.totalorder %s199, %s201
      %p205 = scmp.eq.s32.totalorder %s18, 0
      %p206 = por %p204, %p205
      %p207 = scmp.ne.s32.totalorder %s199, %s201
      %p208 = scmp.eq.s32.totalorder %s23, 1
      %p209 = por %p207, %p208
      %p210 = scmp.ne.s32.totalorder %s201, %s202
      %p211 = scmp.eq.s32.totalorder %s23, 0
      %p212 = por %p210, %p211
      %p213 = scmp.ne.s32.totalorder %s201, %s202
      %p214 = scmp.eq.s32.totalorder %s24, 1
      %p215 = por %p213, %p214
      %p217 = scmp.ne.s32.totalorder %s202, %s216
      %p218 = scmp.eq.s32.totalorder %s24, 0
      %p219 = por %p217, %p218
      %s220 = ssub.s32 %s18, %s25
      %p221 = scmp.eq.s32.totalorder %s220, 0
      %s223 = sadd.s32 %s222, 1
      %s224 = scalar_select %p221, %s222, %s223
      %p227 = pneg %p221
      %p228 = scmp.eq.s32.totalorder %s18, 1
      %p229 = por %p227, %p228
      %p230 = scmp.ne.s32.totalorder %s222, %s225
      %p231 = scmp.eq.s32.totalorder %s18, 0
      %p232 = por %p230, %p231
      %p233 = scmp.ne.s32.totalorder %s222, %s225
      %p234 = scmp.eq.s32.totalorder %s23, 1
      %p235 = por %p233, %p234
      %p236 = scmp.ne.s32.totalorder %s225, %s226
      %p237 = scmp.eq.s32.totalorder %s23, 0
      %p238 = por %p236, %p237
      %p239 = scmp.ne.s32.totalorder %s225, %s226
      %p240 = scmp.eq.s32.totalorder %s24, 1
      %p241 = por %p239, %p240
      %p243 = scmp.ne.s32.totalorder %s226, %s242
      %p244 = scmp.eq.s32.totalorder %s24, 0
      %p245 = por %p243, %p244
      %p246 = scmp.le.s32.totalorder 1, %s18
      %p247 = scmp.lt.s32.totalorder %s18, 3
      %p248 = pnand %p246, %p247
      %p249 = pneg %p248
      // Predicated region
      $region9: #{tpu_custom_call.1} parent=5 // pred_check
        _
      $region10: #{tpu_custom_call.1} parent=5 // pred_check_branch
        %251 = sbr.rel (%p248) target = $region12
      $region11: #{tpu_custom_call.1} parent=5 // pred_region
        %s252 = ssub.s32 %s18, 1
        // Predicated region
        $region13: #{tpu_custom_call.1} parent=11 // pred_check
          %p253 = pneg %p65
        $region14: #{tpu_custom_call.1} parent=11 // pred_check_branch
          %255 = sbr.rel (%p253) target = $region16
        $region15: #{tpu_custom_call.1} parent=11 // pred_region
          _
        $region16: #{tpu_custom_call.1} parent=11 // pred_fallthru
          _
        // Predicated region
        $region17: #{tpu_custom_call.1} parent=11 // pred_check
          %p256 = pneg %p86
        $region18: #{tpu_custom_call.1} parent=11 // pred_check_branch
          %258 = sbr.rel (%p256) target = $region20
        $region19: #{tpu_custom_call.1} parent=11 // pred_region
          _
        $region20: #{tpu_custom_call.1} parent=11 // pred_fallthru
          _
        // Predicated region
        $region21: #{tpu_custom_call.1} parent=11 // pred_check
          %p259 = pneg %p107
        $region22: #{tpu_custom_call.1} parent=11 // pred_check_branch
          %261 = sbr.rel (%p259) target = $region24
        $region23: #{tpu_custom_call.1} parent=11 // pred_region
          _
        $region24: #{tpu_custom_call.1} parent=11 // pred_fallthru
          _
        // Predicated region
        $region25: #{tpu_custom_call.1} parent=11 // pred_check
          %p262 = pneg %p128
        $region26: #{tpu_custom_call.1} parent=11 // pred_check_branch
          %264 = sbr.rel (%p262) target = $region28
        $region27: #{tpu_custom_call.1} parent=11 // pred_region
          _
        $region28: #{tpu_custom_call.1} parent=11 // pred_fallthru
          _
        // Predicated region
        $region29: #{tpu_custom_call.1} parent=11 // pred_check
          %p265 = pneg %p149
        $region30: #{tpu_custom_call.1} parent=11 // pred_check_branch
          %267 = sbr.rel (%p265) target = $region32
        $region31: #{tpu_custom_call.1} parent=11 // pred_region
          _
        $region32: #{tpu_custom_call.1} parent=11 // pred_fallthru
          _
        // Predicated region
        $region33: #{tpu_custom_call.1} parent=11 // pred_check
          %p268 = pneg %p170
        $region34: #{tpu_custom_call.1} parent=11 // pred_check_branch
          %270 = sbr.rel (%p268) target = $region36
        $region35: #{tpu_custom_call.1} parent=11 // pred_region
          _
        $region36: #{tpu_custom_call.1} parent=11 // pred_fallthru
          _
        // Predicated region
        $region37: #{tpu_custom_call.1} parent=11 // pred_check
          %p271 = pneg %p191
        $region38: #{tpu_custom_call.1} parent=11 // pred_check_branch
          %273 = sbr.rel (%p271) target = $region40
        $region39: #{tpu_custom_call.1} parent=11 // pred_region
          _
        $region40: #{tpu_custom_call.1} parent=11 // pred_fallthru
          _
        // Predicated region
        $region41: #{tpu_custom_call.1} parent=11 // pred_check
          %p274 = pneg %p212
        $region42: #{tpu_custom_call.1} parent=11 // pred_check_branch
          %276 = sbr.rel (%p274) target = $region44
        $region43: #{tpu_custom_call.1} parent=11 // pred_region
          _
        $region44: #{tpu_custom_call.1} parent=11 // pred_fallthru
          _
      $region12: #{tpu_custom_call.1} parent=5 // pred_fallthru
        _
      %p277 = scmp.lt.s32.totalorder %s18, 2
      // Predicated region
      $region45: #{tpu_custom_call.1} parent=5 // pred_check
        %p278 = pneg %p277
      $region46: #{tpu_custom_call.1} parent=5 // pred_check_branch
        %280 = sbr.rel (%p278) target = $region48
      $region47: #{tpu_custom_call.1} parent=5 // pred_region
        // Predicated region
        $region49: #{tpu_custom_call.1} parent=47 // pred_check
          %p281 = pneg %p38
        $region50: #{tpu_custom_call.1} parent=47 // pred_check_branch
          %283 = sbr.rel (%p281) target = $region52
        $region51: #{tpu_custom_call.1} parent=47 // pred_region
          %p284 = scmp.lt.s32.totalorder %s18, 1
          %s285 = scalar_select %p284, %s18, 1
          %s286 = smul.addr %s285, 2
          %s287 = scalar_lea.vmem %s0, %s286
        $region52: #{tpu_custom_call.1} parent=47 // pred_fallthru
          _
      $region48: #{tpu_custom_call.1} parent=5 // pred_fallthru
        _
      %p288 = scmp.le.s32.totalorder 1, %s18
      %p289 = scmp.lt.s32.totalorder %s18, 3
      %p290 = pnand %p288, %p289
      %p291 = pneg %p290
      // Predicated region
      $region53: #{tpu_custom_call.1} parent=5 // pred_check
        _
      $region54: #{tpu_custom_call.1} parent=5 // pred_check_branch
        %293 = sbr.rel (%p290) target = $region56
      $region55: #{tpu_custom_call.1} parent=5 // pred_region
        %s294 = ssub.s32 %s18, 1
        %p295 = scmp.lt.s32.totalorder %s23, 1
        %s296 = scalar_select %p295, %s23, 1
        %s297 = smul.addr %s296, 2
        %s298 = scalar_lea.vmem %s0, %s297
        %p299 = pneg %p44
        %p300 = pneg %p41
        %p301 = pneg %p65
        %p302 = pneg %p62
        %p303 = pneg %p86
        %p304 = pneg %p83
        %p305 = pneg %p107
        %p306 = pneg %p104
        %p307 = pneg %p128
        %p308 = pneg %p125
        %p309 = pneg %p149
        %p310 = pneg %p146
        %p311 = pneg %p170
        %p312 = pneg %p167
        %p313 = pneg %p191
        %p314 = pneg %p188
        %p315 = pneg %p212
        %p316 = pneg %p209
        %p317 = pneg %p238
        %p318 = pneg %p235
        %s319 = sand.u32 %s225, 1
        %s320 = scalar_lea.sflag [#allocation3], %s319
        %s321 = sand.u32 %s225, 1
        %s322 = smul.addr %s321, 32
        %s323 = scalar_lea.vmem [#allocation2], %s322
        %p324 = scmp.lt.s32.totalorder %s23, 1
        %s325 = scalar_select %p324, %s23, 1
        %s326 = smul.addr %s325, 2
        %s327 = scalar_lea.vmem %s0, %s326
        %v328 = vld [vmem:[%s327] sm:$0x3]
        %v329 = vld [vmem:[%s1] sm:$0xff]
        %v330 = vld [vmem:[%s1 + $0x8] sm:$0xff]
        %v331 = vld [vmem:[%s1 + $0x10] sm:$0xff]
        %v332 = vld [vmem:[%s1 + $0x18] sm:$0xff]
        %v333 = vld [vmem:[%s2] sm:$0xff]
        %v334 = vld [vmem:[%s2 + $0x8] sm:$0xff]
        %v335 = vld [vmem:[%s2 + $0x10] sm:$0xff]
        %v336 = vld [vmem:[%s2 + $0x18] sm:$0xff]
        %338 = vset.pattern.permute.xlu0 0
        %339 = vperm.xlu0 %338, %v329
        %v340 = vpop.permute.xlu0 %339
        %343 = vset.pattern.permute.xlu0 0
        %344 = vperm.xlu0 %343, %v330
        %v345 = vpop.permute.xlu0 %344
        %348 = vset.pattern.permute.xlu0 0
        %349 = vperm.xlu0 %348, %v331
        %v350 = vpop.permute.xlu0 %349
        %353 = vset.pattern.permute.xlu0 0
        %354 = vperm.xlu0 %353, %v332
        %v355 = vpop.permute.xlu0 %354
        %v357 = vperm.slane %v328, 0
        %v358 = vmul.f32 %v340, %v357
        %v359 = vmul.f32 %v345, %v357
        %v360 = vmul.f32 %v350, %v357
        %v361 = vmul.f32 %v355, %v357
        %363 = vset.pattern.permute.xlu0 0
        %364 = vperm.xlu0 %363, %v333
        %v365 = vpop.permute.xlu0 %364
        %368 = vset.pattern.permute.xlu0 0
        %369 = vperm.xlu0 %368, %v334
        %v370 = vpop.permute.xlu0 %369
        %373 = vset.pattern.permute.xlu0 0
        %374 = vperm.xlu0 %373, %v335
        %v375 = vpop.permute.xlu0 %374
        %378 = vset.pattern.permute.xlu0 0
        %379 = vperm.xlu0 %378, %v336
        %v380 = vpop.permute.xlu0 %379
        %v382 = vadd.f32 %v365, %v358
        %v383 = vadd.f32 %v370, %v359
        %v384 = vadd.f32 %v375, %v360
        %v385 = vadd.f32 %v380, %v361
        %386 = vset.pattern.permute.xlu0 1
        %387 = vperm.xlu0 %386, %v329
        %v388 = vpop.permute.xlu0 %387
        %390 = vset.pattern.permute.xlu0 1
        %391 = vperm.xlu0 %390, %v330
        %v392 = vpop.permute.xlu0 %391
        %394 = vset.pattern.permute.xlu0 1
        %395 = vperm.xlu0 %394, %v331
        %v396 = vpop.permute.xlu0 %395
        %398 = vset.pattern.permute.xlu0 1
        %399 = vperm.xlu0 %398, %v332
        %v400 = vpop.permute.xlu0 %399
        %v402 = vperm.slane %v328, 1
        %v403 = vmul.f32 %v388, %v402
        %v404 = vmul.f32 %v392, %v402
        %v405 = vmul.f32 %v396, %v402
        %v406 = vmul.f32 %v400, %v402
        %v407 = vadd.f32 %v382, %v403
        %v408 = vadd.f32 %v383, %v404
        %v409 = vadd.f32 %v384, %v405
        %v410 = vadd.f32 %v385, %v406
        %v411 = vmul.f32 %v407, 30.0
        %v412 = vmul.f32 %v408, 30.0
        %v413 = vmul.f32 %v409, 30.0
        %v414 = vmul.f32 %v410, 30.0
        %v415 = vand.u32 2147483647, %v411
        %vm416 = vcmp.le.f32.partialorder %v415, 0.7853982
        %vm417 = vcmp.lt.s32.totalorder %v411, 0
        %v418 = vand.u32 %v411, 2139095040
        %v419 = vshrl.u32 %v418, 23
        %v420 = vsub.s32 %v419, 127
        %v421 = vand.u32 2147483647, %v411
        %v422 = vand.u32 %v421, 8388607
        %v423 = vor.u32 %v422, 8388608
        %v424 = vsub.s32 0, %v423
        %v425 = vadd.s32 %v420, 1
        %vm426 = vcmp.gt.s32.totalorder %v425, 0
        %v427 = vsel %vm426, %v425, 0
        %v428 = vshrl.u32 %v427, 5
        %v429 = vand.u32 %v427, 31
        %v430 = vsub.s32 32, %v429
        %v431 = vshrl.u32 683565275, %v430
        %v432 = vshll.u32 683565275, %v429
        %v433 = vshrl.u32 2475754826, %v430
        %v434 = vor.u32 %v432, %v433
        %v435 = vshll.u32 2475754826, %v429
        %v436 = vshrl.u32 2131351028, %v430
        %v437 = vor.u32 %v435, %v436
        %v438 = vshll.u32 2131351028, %v429
        %v439 = vshrl.u32 2102212464, %v430
        %v440 = vor.u32 %v438, %v439
        %v441 = vshll.u32 2102212464, %v429
        %v442 = vshrl.u32 920167782, %v430
        %v443 = vor.u32 %v441, %v442
        %v444 = vshll.u32 920167782, %v429
        %v445 = vshrl.u32 1326507024, %v430
        %v446 = vor.u32 %v444, %v445
        %vm447 = vcmp.lt.s32.totalorder %v428, 1
        %vm448 = vcmp.lt.s32.totalorder %v428, 2
        %vm449 = vcmp.lt.s32.totalorder %v428, 3
        %vm450 = vcmp.lt.s32.totalorder %v428, 4
        %v451 = vsel %vm447, %v431, %v434
        %v452 = vsel %vm450, %v440, 2102212464
        %v453 = vsel %vm449, %v437, %v452
        %v454 = vsel %vm448, %v451, %v453
        %v455 = vsel %vm447, %v434, %v437
        %v456 = vsel %vm450, %v443, 920167782
        %v457 = vsel %vm449, %v440, %v456
        %v458 = vsel %vm448, %v455, %v457
        %v459 = vsel %vm447, %v437, %v440
        %v460 = vsel %vm450, %v446, 1326507024
        %v461 = vsel %vm449, %v443, %v460
        %v462 = vsel %vm448, %v459, %v461
        %v463 = vshll.u32 %v423, 8
        %v464 = vand.u32 %v463, 65535
        %v465 = vshrl.u32 %v463, 16
        %v466 = vand.u32 %v462, 65535
        %v467 = vshrl.u32 %v462, 16
        %v468 = vmul.u32 %v464, %v466
        %v469 = vmul.u32 %v464, %v467
        %v470 = vmul.u32 %v465, %v466
        %v471 = vmul.u32 %v465, %v467
        %v472 = vshll.u32 %v469, 16
        %v473 = vshrl.u32 %v469, 16
        %v474 = vshll.u32 %v470, 16
        %v475 = vshrl.u32 %v470, 16
        %vm476 = vc.u32 %v468, %v472
        %v477 = vsel %vm476, 1, 0
        %v478 = vadd.s32 %v468, %v472
        %v479 = vadd.s32 %v471, %v477
        %vm480 = vc.u32 %v478, %v474
        %v481 = vsel %vm480, 1, 0
        %v482 = vadd.s32 %v478, %v474
        %v483 = vadd.s32 %v479, %v481
        %v484 = vadd.s32 %v483, %v473
        %v485 = vadd.s32 %v484, %v475
        %v486 = vand.u32 %v463, 65535
        %v487 = vshrl.u32 %v463, 16
        %v488 = vand.u32 %v458, 65535
        %v489 = vshrl.u32 %v458, 16
        %v490 = vmul.u32 %v486, %v488
        %v491 = vmul.u32 %v486, %v489
        %v492 = vmul.u32 %v487, %v488
        %v493 = vmul.u32 %v487, %v489
        %v494 = vshll.u32 %v491, 16
        %v495 = vshrl.u32 %v491, 16
        %v496 = vshll.u32 %v492, 16
        %v497 = vshrl.u32 %v492, 16
        %vm498 = vc.u32 %v490, %v494
        %v499 = vsel %vm498, 1, 0
        %v500 = vadd.s32 %v490, %v494
        %v501 = vadd.s32 %v493, %v499
        %vm502 = vc.u32 %v500, %v496
        %v503 = vsel %vm502, 1, 0
        %v504 = vadd.s32 %v500, %v496
        %v505 = vadd.s32 %v501, %v503
        %v506 = vadd.s32 %v505, %v495
        %v507 = vadd.s32 %v506, %v497
        %v508 = vmul.u32 %v463, %v454
        %v509 = vadd.s32 %v485, %v504
        %vm510 = vc.u32 %v485, %v504
        %v511 = vadd.s32 %v507, 1
        %v512 = vsel %vm510, %v511, %v507
        %v513 = vadd.s32 %v508, %v512
        %v514 = vadd.s32 %v513, 536870912
        %v515 = vshrl.u32 %v514, 30
        %v516 = vshll.u32 %v515, 30
        %v517 = vsub.s32 %v513, %v516
        %vm518 = vcmp.lt.s32.totalorder %v517, 0
        %v519 = vsub.s32 0, %v517
        %v520 = vsel %vm518, %v519, %v517
        %v521 = vclz %v520
        %v522 = vsub.s32 %v521, 2
        %vm523 = vcmp.gt.s32.totalorder 0, %v522
        %v524 = vsel %vm523, 0, %v522
        %v525 = vsub.s32 32, %v524
        %v526 = vshll.u32 %v517, %v524
        %v527 = vshrl.u32 %v509, %v525
        %v528 = vor.u32 %v526, %v527
        %v529 = vsub.s32 4294967266, %v524
        %v530 = vadd.s32 %v529, 127
        %v531 = vshll.u32 %v530, 23
        %v532 = vor.u32 4788187, %v531
        %v533 = vand.u32 2147483647, %v532
        %v535 = vcvt.s32.f32 %v528
        %v536 = vmul.f32 %v535, %v533
        %v537 = vxor.u32 %v536, 2147483648
        %v538 = vsel %vm417, %v537, %v536
        %v539 = vsub.s32 4, %v515
        %v540 = vsel %vm417, %v539, %v515
        %v541 = vsel %vm416, %v411, %v538
        %v542 = vsel %vm416, 0, %v540
        %v543 = vmul.f32 %v541, %v541
        %v544 = vmul.f32 %v543, -0.001358992
        %v545 = vadd.f32 %v544, 0.041655596
        %v546 = vmul.f32 %v543, %v545
        %v547 = vadd.f32 %v546, -0.4999988
        %v548 = vmul.f32 %v543, %v547
        %v549 = vadd.f32 1.0, %v548
        %v550 = vmul.f32 %v541, %v541
        %v551 = vmul.f32 %v550, -0.00019511016
        %v552 = vadd.f32 %v551, 0.008332121
        %v553 = vmul.f32 %v550, %v552
        %v554 = vadd.f32 %v553, -0.16666654
        %v555 = vmul.f32 %v550, %v554
        %v556 = vadd.f32 %v555, 1.0
        %v557 = vmul.f32 %v556, %v541
        %vm558 = vweird.f32 %v411
        %v559 = vadd.s32 %v542, 3
        %v560 = vand.u32 %v559, 3
        %vm561 = vcmp.lt.s32.totalorder %v560, 2
        %vm562 = vcmp.eq.s32.totalorder %v560, 0
        %v563 = vxor.u32 %v557, 2147483648
        %v564 = vsel %vm562, %v549, %v563
        %vm565 = vcmp.eq.s32.totalorder %v560, 2
        %v566 = vxor.u32 %v549, 2147483648
        %v567 = vsel %vm565, %v566, %v557
        %v568 = vsel %vm561, %v564, %v567
        %v569 = vsel %vm558, nan, %v568
        %v570 = vand.u32 2147483647, %v412
        %vm571 = vcmp.le.f32.partialorder %v570, 0.7853982
        %vm572 = vcmp.lt.s32.totalorder %v412, 0
        %v573 = vand.u32 %v412, 2139095040
        %v574 = vshrl.u32 %v573, 23
        %v575 = vsub.s32 %v574, 127
        %v576 = vand.u32 2147483647, %v412
        %v577 = vand.u32 %v576, 8388607
        %v578 = vor.u32 %v577, 8388608
        %v579 = vsub.s32 0, %v578
        %v580 = vadd.s32 %v575, 1
        %vm581 = vcmp.gt.s32.totalorder %v580, 0
        %v582 = vsel %vm581, %v580, 0
        %v583 = vshrl.u32 %v582, 5
        %v584 = vand.u32 %v582, 31
        %v585 = vsub.s32 32, %v584
        %v586 = vshrl.u32 683565275, %v585
        %v587 = vshll.u32 683565275, %v584
        %v588 = vshrl.u32 2475754826, %v585
        %v589 = vor.u32 %v587, %v588
        %v590 = vshll.u32 2475754826, %v584
        %v591 = vshrl.u32 2131351028, %v585
        %v592 = vor.u32 %v590, %v591
        %v593 = vshll.u32 2131351028, %v584
        %v594 = vshrl.u32 2102212464, %v585
        %v595 = vor.u32 %v593, %v594
        %v596 = vshll.u32 2102212464, %v584
        %v597 = vshrl.u32 920167782, %v585
        %v598 = vor.u32 %v596, %v597
        %v599 = vshll.u32 920167782, %v584
        %v600 = vshrl.u32 1326507024, %v585
        %v601 = vor.u32 %v599, %v600
        %vm602 = vcmp.lt.s32.totalorder %v583, 1
        %vm603 = vcmp.lt.s32.totalorder %v583, 2
        %vm604 = vcmp.lt.s32.totalorder %v583, 3
        %vm605 = vcmp.lt.s32.totalorder %v583, 4
        %v606 = vsel %vm602, %v586, %v589
        %v607 = vsel %vm605, %v595, 2102212464
        %v608 = vsel %vm604, %v592, %v607
        %v609 = vsel %vm603, %v606, %v608
        %v610 = vsel %vm602, %v589, %v592
        %v611 = vsel %vm605, %v598, 920167782
        %v612 = vsel %vm604, %v595, %v611
        %v613 = vsel %vm603, %v610, %v612
        %v614 = vsel %vm602, %v592, %v595
        %v615 = vsel %vm605, %v601, 1326507024
        %v616 = vsel %vm604, %v598, %v615
        %v617 = vsel %vm603, %v614, %v616
        %v618 = vshll.u32 %v578, 8
        %v619 = vand.u32 %v618, 65535
        %v620 = vshrl.u32 %v618, 16
        %v621 = vand.u32 %v617, 65535
        %v622 = vshrl.u32 %v617, 16
        %v623 = vmul.u32 %v619, %v621
        %v624 = vmul.u32 %v619, %v622
        %v625 = vmul.u32 %v620, %v621
        %v626 = vmul.u32 %v620, %v622
        %v627 = vshll.u32 %v624, 16
        %v628 = vshrl.u32 %v624, 16
        %v629 = vshll.u32 %v625, 16
        %v630 = vshrl.u32 %v625, 16
        %vm631 = vc.u32 %v623, %v627
        %v632 = vsel %vm631, 1, 0
        %v633 = vadd.s32 %v623, %v627
        %v634 = vadd.s32 %v626, %v632
        %vm635 = vc.u32 %v633, %v629
        %v636 = vsel %vm635, 1, 0
        %v637 = vadd.s32 %v633, %v629
        %v638 = vadd.s32 %v634, %v636
        %v639 = vadd.s32 %v638, %v628
        %v640 = vadd.s32 %v639, %v630
        %v641 = vand.u32 %v618, 65535
        %v642 = vshrl.u32 %v618, 16
        %v643 = vand.u32 %v613, 65535
        %v644 = vshrl.u32 %v613, 16
        %v645 = vmul.u32 %v641, %v643
        %v646 = vmul.u32 %v641, %v644
        %v647 = vmul.u32 %v642, %v643
        %v648 = vmul.u32 %v642, %v644
        %v649 = vshll.u32 %v646, 16
        %v650 = vshrl.u32 %v646, 16
        %v651 = vshll.u32 %v647, 16
        %v652 = vshrl.u32 %v647, 16
        %vm653 = vc.u32 %v645, %v649
        %v654 = vsel %vm653, 1, 0
        %v655 = vadd.s32 %v645, %v649
        %v656 = vadd.s32 %v648, %v654
        %vm657 = vc.u32 %v655, %v651
        %v658 = vsel %vm657, 1, 0
        %v659 = vadd.s32 %v655, %v651
        %v660 = vadd.s32 %v656, %v658
        %v661 = vadd.s32 %v660, %v650
        %v662 = vadd.s32 %v661, %v652
        %v663 = vmul.u32 %v618, %v609
        %v664 = vadd.s32 %v640, %v659
        %vm665 = vc.u32 %v640, %v659
        %v666 = vadd.s32 %v662, 1
        %v667 = vsel %vm665, %v666, %v662
        %v668 = vadd.s32 %v663, %v667
        %v669 = vadd.s32 %v668, 536870912
        %v670 = vshrl.u32 %v669, 30
        %v671 = vshll.u32 %v670, 30
        %v672 = vsub.s32 %v668, %v671
        %vm673 = vcmp.lt.s32.totalorder %v672, 0
        %v674 = vsub.s32 0, %v672
        %v675 = vsel %vm673, %v674, %v672
        %v676 = vclz %v675
        %v677 = vsub.s32 %v676, 2
        %vm678 = vcmp.gt.s32.totalorder 0, %v677
        %v679 = vsel %vm678, 0, %v677
        %v680 = vsub.s32 32, %v679
        %v681 = vshll.u32 %v672, %v679
        %v682 = vshrl.u32 %v664, %v680
        %v683 = vor.u32 %v681, %v682
        %v684 = vsub.s32 4294967266, %v679
        %v685 = vadd.s32 %v684, 127
        %v686 = vshll.u32 %v685, 23
        %v687 = vor.u32 4788187, %v686
        %v688 = vand.u32 2147483647, %v687
        %v690 = vcvt.s32.f32 %v683
        %v691 = vmul.f32 %v690, %v688
        %v692 = vxor.u32 %v691, 2147483648
        %v693 = vsel %vm572, %v692, %v691
        %v694 = vsub.s32 4, %v670
        %v695 = vsel %vm572, %v694, %v670
        %v696 = vsel %vm571, %v412, %v693
        %v697 = vsel %vm571, 0, %v695
        %v698 = vmul.f32 %v696, %v696
        %v699 = vmul.f32 %v698, -0.001358992
        %v700 = vadd.f32 %v699, 0.041655596
        %v701 = vmul.f32 %v698, %v700
        %v702 = vadd.f32 %v701, -0.4999988
        %v703 = vmul.f32 %v698, %v702
        %v704 = vadd.f32 1.0, %v703
        %v705 = vmul.f32 %v696, %v696
        %v706 = vmul.f32 %v705, -0.00019511016
        %v707 = vadd.f32 %v706, 0.008332121
        %v708 = vmul.f32 %v705, %v707
        %v709 = vadd.f32 %v708, -0.16666654
        %v710 = vmul.f32 %v705, %v709
        %v711 = vadd.f32 %v710, 1.0
        %v712 = vmul.f32 %v711, %v696
        %vm713 = vweird.f32 %v412
        %v714 = vadd.s32 %v697, 3
        %v715 = vand.u32 %v714, 3
        %vm716 = vcmp.lt.s32.totalorder %v715, 2
        %vm717 = vcmp.eq.s32.totalorder %v715, 0
        %v718 = vxor.u32 %v712, 2147483648
        %v719 = vsel %vm717, %v704, %v718
        %vm720 = vcmp.eq.s32.totalorder %v715, 2
        %v721 = vxor.u32 %v704, 2147483648
        %v722 = vsel %vm720, %v721, %v712
        %v723 = vsel %vm716, %v719, %v722
        %v724 = vsel %vm713, nan, %v723
        %v725 = vand.u32 2147483647, %v413
        %vm726 = vcmp.le.f32.partialorder %v725, 0.7853982
        %vm727 = vcmp.lt.s32.totalorder %v413, 0
        %v728 = vand.u32 %v413, 2139095040
        %v729 = vshrl.u32 %v728, 23
        %v730 = vsub.s32 %v729, 127
        %v731 = vand.u32 2147483647, %v413
        %v732 = vand.u32 %v731, 8388607
        %v733 = vor.u32 %v732, 8388608
        %v734 = vsub.s32 0, %v733
        %v735 = vadd.s32 %v730, 1
        %vm736 = vcmp.gt.s32.totalorder %v735, 0
        %v737 = vsel %vm736, %v735, 0
        %v738 = vshrl.u32 %v737, 5
        %v739 = vand.u32 %v737, 31
        %v740 = vsub.s32 32, %v739
        %v741 = vshrl.u32 683565275, %v740
        %v742 = vshll.u32 683565275, %v739
        %v743 = vshrl.u32 2475754826, %v740
        %v744 = vor.u32 %v742, %v743
        %v745 = vshll.u32 2475754826, %v739
        %v746 = vshrl.u32 2131351028, %v740
        %v747 = vor.u32 %v745, %v746
        %v748 = vshll.u32 2131351028, %v739
        %v749 = vshrl.u32 2102212464, %v740
        %v750 = vor.u32 %v748, %v749
        %v751 = vshll.u32 2102212464, %v739
        %v752 = vshrl.u32 920167782, %v740
        %v753 = vor.u32 %v751, %v752
        %v754 = vshll.u32 920167782, %v739
        %v755 = vshrl.u32 1326507024, %v740
        %v756 = vor.u32 %v754, %v755
        %vm757 = vcmp.lt.s32.totalorder %v738, 1
        %vm758 = vcmp.lt.s32.totalorder %v738, 2
        %vm759 = vcmp.lt.s32.totalorder %v738, 3
        %vm760 = vcmp.lt.s32.totalorder %v738, 4
        %v761 = vsel %vm757, %v741, %v744
        %v762 = vsel %vm760, %v750, 2102212464
        %v763 = vsel %vm759, %v747, %v762
        %v764 = vsel %vm758, %v761, %v763
        %v765 = vsel %vm757, %v744, %v747
        %v766 = vsel %vm760, %v753, 920167782
        %v767 = vsel %vm759, %v750, %v766
        %v768 = vsel %vm758, %v765, %v767
        %v769 = vsel %vm757, %v747, %v750
        %v770 = vsel %vm760, %v756, 1326507024
        %v771 = vsel %vm759, %v753, %v770
        %v772 = vsel %vm758, %v769, %v771
        %v773 = vshll.u32 %v733, 8
        %v774 = vand.u32 %v773, 65535
        %v775 = vshrl.u32 %v773, 16
        %v776 = vand.u32 %v772, 65535
        %v777 = vshrl.u32 %v772, 16
        %v778 = vmul.u32 %v774, %v776
        %v779 = vmul.u32 %v774, %v777
        %v780 = vmul.u32 %v775, %v776
        %v781 = vmul.u32 %v775, %v777
        %v782 = vshll.u32 %v779, 16
        %v783 = vshrl.u32 %v779, 16
        %v784 = vshll.u32 %v780, 16
        %v785 = vshrl.u32 %v780, 16
        %vm786 = vc.u32 %v778, %v782
        %v787 = vsel %vm786, 1, 0
        %v788 = vadd.s32 %v778, %v782
        %v789 = vadd.s32 %v781, %v787
        %vm790 = vc.u32 %v788, %v784
        %v791 = vsel %vm790, 1, 0
        %v792 = vadd.s32 %v788, %v784
        %v793 = vadd.s32 %v789, %v791
        %v794 = vadd.s32 %v793, %v783
        %v795 = vadd.s32 %v794, %v785
        %v796 = vand.u32 %v773, 65535
        %v797 = vshrl.u32 %v773, 16
        %v798 = vand.u32 %v768, 65535
        %v799 = vshrl.u32 %v768, 16
        %v800 = vmul.u32 %v796, %v798
        %v801 = vmul.u32 %v796, %v799
        %v802 = vmul.u32 %v797, %v798
        %v803 = vmul.u32 %v797, %v799
        %v804 = vshll.u32 %v801, 16
        %v805 = vshrl.u32 %v801, 16
        %v806 = vshll.u32 %v802, 16
        %v807 = vshrl.u32 %v802, 16
        %vm808 = vc.u32 %v800, %v804
        %v809 = vsel %vm808, 1, 0
        %v810 = vadd.s32 %v800, %v804
        %v811 = vadd.s32 %v803, %v809
        %vm812 = vc.u32 %v810, %v806
        %v813 = vsel %vm812, 1, 0
        %v814 = vadd.s32 %v810, %v806
        %v815 = vadd.s32 %v811, %v813
        %v816 = vadd.s32 %v815, %v805
        %v817 = vadd.s32 %v816, %v807
        %v818 = vmul.u32 %v773, %v764
        %v819 = vadd.s32 %v795, %v814
        %vm820 = vc.u32 %v795, %v814
        %v821 = vadd.s32 %v817, 1
        %v822 = vsel %vm820, %v821, %v817
        %v823 = vadd.s32 %v818, %v822
        %v824 = vadd.s32 %v823, 536870912
        %v825 = vshrl.u32 %v824, 30
        %v826 = vshll.u32 %v825, 30
        %v827 = vsub.s32 %v823, %v826
        %vm828 = vcmp.lt.s32.totalorder %v827, 0
        %v829 = vsub.s32 0, %v827
        %v830 = vsel %vm828, %v829, %v827
        %v831 = vclz %v830
        %v832 = vsub.s32 %v831, 2
        %vm833 = vcmp.gt.s32.totalorder 0, %v832
        %v834 = vsel %vm833, 0, %v832
        %v835 = vsub.s32 32, %v834
        %v836 = vshll.u32 %v827, %v834
        %v837 = vshrl.u32 %v819, %v835
        %v838 = vor.u32 %v836, %v837
        %v839 = vsub.s32 4294967266, %v834
        %v840 = vadd.s32 %v839, 127
        %v841 = vshll.u32 %v840, 23
        %v842 = vor.u32 4788187, %v841
        %v843 = vand.u32 2147483647, %v842
        %v845 = vcvt.s32.f32 %v838
        %v846 = vmul.f32 %v845, %v843
        %v847 = vxor.u32 %v846, 2147483648
        %v848 = vsel %vm727, %v847, %v846
        %v849 = vsub.s32 4, %v825
        %v850 = vsel %vm727, %v849, %v825
        %v851 = vsel %vm726, %v413, %v848
        %v852 = vsel %vm726, 0, %v850
        %v853 = vmul.f32 %v851, %v851
        %v854 = vmul.f32 %v853, -0.001358992
        %v855 = vadd.f32 %v854, 0.041655596
        %v856 = vmul.f32 %v853, %v855
        %v857 = vadd.f32 %v856, -0.4999988
        %v858 = vmul.f32 %v853, %v857
        %v859 = vadd.f32 1.0, %v858
        %v860 = vmul.f32 %v851, %v851
        %v861 = vmul.f32 %v860, -0.00019511016
        %v862 = vadd.f32 %v861, 0.008332121
        %v863 = vmul.f32 %v860, %v862
        %v864 = vadd.f32 %v863, -0.16666654
        %v865 = vmul.f32 %v860, %v864
        %v866 = vadd.f32 %v865, 1.0
        %v867 = vmul.f32 %v866, %v851
        %vm868 = vweird.f32 %v413
        %v869 = vadd.s32 %v852, 3
        %v870 = vand.u32 %v869, 3
        %vm871 = vcmp.lt.s32.totalorder %v870, 2
        %vm872 = vcmp.eq.s32.totalorder %v870, 0
        %v873 = vxor.u32 %v867, 2147483648
        %v874 = vsel %vm872, %v859, %v873
        %vm875 = vcmp.eq.s32.totalorder %v870, 2
        %v876 = vxor.u32 %v859, 2147483648
        %v877 = vsel %vm875, %v876, %v867
        %v878 = vsel %vm871, %v874, %v877
        %v879 = vsel %vm868, nan, %v878
        %v880 = vand.u32 2147483647, %v414
        %vm881 = vcmp.le.f32.partialorder %v880, 0.7853982
        %vm882 = vcmp.lt.s32.totalorder %v414, 0
        %v883 = vand.u32 %v414, 2139095040
        %v884 = vshrl.u32 %v883, 23
        %v885 = vsub.s32 %v884, 127
        %v886 = vand.u32 2147483647, %v414
        %v887 = vand.u32 %v886, 8388607
        %v888 = vor.u32 %v887, 8388608
        %v889 = vsub.s32 0, %v888
        %v890 = vadd.s32 %v885, 1
        %vm891 = vcmp.gt.s32.totalorder %v890, 0
        %v892 = vsel %vm891, %v890, 0
        %v893 = vshrl.u32 %v892, 5
        %v894 = vand.u32 %v892, 31
        %v895 = vsub.s32 32, %v894
        %v896 = vshrl.u32 683565275, %v895
        %v897 = vshll.u32 683565275, %v894
        %v898 = vshrl.u32 2475754826, %v895
        %v899 = vor.u32 %v897, %v898
        %v900 = vshll.u32 2475754826, %v894
        %v901 = vshrl.u32 2131351028, %v895
        %v902 = vor.u32 %v900, %v901
        %v903 = vshll.u32 2131351028, %v894
        %v904 = vshrl.u32 2102212464, %v895
        %v905 = vor.u32 %v903, %v904
        %v906 = vshll.u32 2102212464, %v894
        %v907 = vshrl.u32 920167782, %v895
        %v908 = vor.u32 %v906, %v907
        %v909 = vshll.u32 920167782, %v894
        %v910 = vshrl.u32 1326507024, %v895
        %v911 = vor.u32 %v909, %v910
        %vm912 = vcmp.lt.s32.totalorder %v893, 1
        %vm913 = vcmp.lt.s32.totalorder %v893, 2
        %vm914 = vcmp.lt.s32.totalorder %v893, 3
        %vm915 = vcmp.lt.s32.totalorder %v893, 4
        %v916 = vsel %vm912, %v896, %v899
        %v917 = vsel %vm915, %v905, 2102212464
        %v918 = vsel %vm914, %v902, %v917
        %v919 = vsel %vm913, %v916, %v918
        %v920 = vsel %vm912, %v899, %v902
        %v921 = vsel %vm915, %v908, 920167782
        %v922 = vsel %vm914, %v905, %v921
        %v923 = vsel %vm913, %v920, %v922
        %v924 = vsel %vm912, %v902, %v905
        %v925 = vsel %vm915, %v911, 1326507024
        %v926 = vsel %vm914, %v908, %v925
        %v927 = vsel %vm913, %v924, %v926
        %v928 = vshll.u32 %v888, 8
        %v929 = vand.u32 %v928, 65535
        %v930 = vshrl.u32 %v928, 16
        %v931 = vand.u32 %v927, 65535
        %v932 = vshrl.u32 %v927, 16
        %v933 = vmul.u32 %v929, %v931
        %v934 = vmul.u32 %v929, %v932
        %v935 = vmul.u32 %v930, %v931
        %v936 = vmul.u32 %v930, %v932
        %v937 = vshll.u32 %v934, 16
        %v938 = vshrl.u32 %v934, 16
        %v939 = vshll.u32 %v935, 16
        %v940 = vshrl.u32 %v935, 16
        %vm941 = vc.u32 %v933, %v937
        %v942 = vsel %vm941, 1, 0
        %v943 = vadd.s32 %v933, %v937
        %v944 = vadd.s32 %v936, %v942
        %vm945 = vc.u32 %v943, %v939
        %v946 = vsel %vm945, 1, 0
        %v947 = vadd.s32 %v943, %v939
        %v948 = vadd.s32 %v944, %v946
        %v949 = vadd.s32 %v948, %v938
        %v950 = vadd.s32 %v949, %v940
        %v951 = vand.u32 %v928, 65535
        %v952 = vshrl.u32 %v928, 16
        %v953 = vand.u32 %v923, 65535
        %v954 = vshrl.u32 %v923, 16
        %v955 = vmul.u32 %v951, %v953
        %v956 = vmul.u32 %v951, %v954
        %v957 = vmul.u32 %v952, %v953
        %v958 = vmul.u32 %v952, %v954
        %v959 = vshll.u32 %v956, 16
        %v960 = vshrl.u32 %v956, 16
        %v961 = vshll.u32 %v957, 16
        %v962 = vshrl.u32 %v957, 16
        %vm963 = vc.u32 %v955, %v959
        %v964 = vsel %vm963, 1, 0
        %v965 = vadd.s32 %v955, %v959
        %v966 = vadd.s32 %v958, %v964
        %vm967 = vc.u32 %v965, %v961
        %v968 = vsel %vm967, 1, 0
        %v969 = vadd.s32 %v965, %v961
        %v970 = vadd.s32 %v966, %v968
        %v971 = vadd.s32 %v970, %v960
        %v972 = vadd.s32 %v971, %v962
        %v973 = vmul.u32 %v928, %v919
        %v974 = vadd.s32 %v950, %v969
        %vm975 = vc.u32 %v950, %v969
        %v976 = vadd.s32 %v972, 1
        %v977 = vsel %vm975, %v976, %v972
        %v978 = vadd.s32 %v973, %v977
        %v979 = vadd.s32 %v978, 536870912
        %v980 = vshrl.u32 %v979, 30
        %v981 = vshll.u32 %v980, 30
        %v982 = vsub.s32 %v978, %v981
        %vm983 = vcmp.lt.s32.totalorder %v982, 0
        %v984 = vsub.s32 0, %v982
        %v985 = vsel %vm983, %v984, %v982
        %v986 = vclz %v985
        %v987 = vsub.s32 %v986, 2
        %vm988 = vcmp.gt.s32.totalorder 0, %v987
        %v989 = vsel %vm988, 0, %v987
        %v990 = vsub.s32 32, %v989
        %v991 = vshll.u32 %v982, %v989
        %v992 = vshrl.u32 %v974, %v990
        %v993 = vor.u32 %v991, %v992
        %v994 = vsub.s32 4294967266, %v989
        %v995 = vadd.s32 %v994, 127
        %v996 = vshll.u32 %v995, 23
        %v997 = vor.u32 4788187, %v996
        %v998 = vand.u32 2147483647, %v997
        %v1000 = vcvt.s32.f32 %v993
        %v1001 = vmul.f32 %v1000, %v998
        %v1002 = vxor.u32 %v1001, 2147483648
        %v1003 = vsel %vm882, %v1002, %v1001
        %v1004 = vsub.s32 4, %v980
        %v1005 = vsel %vm882, %v1004, %v980
        %v1006 = vsel %vm881, %v414, %v1003
        %v1007 = vsel %vm881, 0, %v1005
        %v1008 = vmul.f32 %v1006, %v1006
        %v1009 = vmul.f32 %v1008, -0.001358992
        %v1010 = vadd.f32 %v1009, 0.041655596
        %v1011 = vmul.f32 %v1008, %v1010
        %v1012 = vadd.f32 %v1011, -0.4999988
        %v1013 = vmul.f32 %v1008, %v1012
        %v1014 = vadd.f32 1.0, %v1013
        %v1015 = vmul.f32 %v1006, %v1006
        %v1016 = vmul.f32 %v1015, -0.00019511016
        %v1017 = vadd.f32 %v1016, 0.008332121
        %v1018 = vmul.f32 %v1015, %v1017
        %v1019 = vadd.f32 %v1018, -0.16666654
        %v1020 = vmul.f32 %v1015, %v1019
        %v1021 = vadd.f32 %v1020, 1.0
        %v1022 = vmul.f32 %v1021, %v1006
        %vm1023 = vweird.f32 %v414
        %v1024 = vadd.s32 %v1007, 3
        %v1025 = vand.u32 %v1024, 3
        %vm1026 = vcmp.lt.s32.totalorder %v1025, 2
        %vm1027 = vcmp.eq.s32.totalorder %v1025, 0
        %v1028 = vxor.u32 %v1022, 2147483648
        %v1029 = vsel %vm1027, %v1014, %v1028
        %vm1030 = vcmp.eq.s32.totalorder %v1025, 2
        %v1031 = vxor.u32 %v1014, 2147483648
        %v1032 = vsel %vm1030, %v1031, %v1022
        %v1033 = vsel %vm1026, %v1029, %v1032
        %v1034 = vsel %vm1023, nan, %v1033
        %v1035 = vld [vmem:[%s3] sm:$0xff]
        %v1036 = vld [vmem:[%s3 + $0x8] sm:$0xff]
        %v1037 = vld [vmem:[%s3 + $0x10] sm:$0xff]
        %v1038 = vld [vmem:[%s3 + $0x18] sm:$0xff]
        %v1039 = vld [vmem:[%s4] sm:$0xff]
        %v1040 = vld [vmem:[%s4 + $0x8] sm:$0xff]
        %v1041 = vld [vmem:[%s4 + $0x10] sm:$0xff]
        %v1042 = vld [vmem:[%s4 + $0x18] sm:$0xff]
        %1044 = vset.pattern.permute.xlu0 0
        %1045 = vperm.xlu0 %1044, %v1039
        %v1046 = vpop.permute.xlu0 %1045
        %1049 = vset.pattern.permute.xlu0 0
        %1050 = vperm.xlu0 %1049, %v1040
        %v1051 = vpop.permute.xlu0 %1050
        %1054 = vset.pattern.permute.xlu0 0
        %1055 = vperm.xlu0 %1054, %v1041
        %v1056 = vpop.permute.xlu0 %1055
        %1059 = vset.pattern.permute.xlu0 0
        %1060 = vperm.xlu0 %1059, %v1042
        %v1061 = vpop.permute.xlu0 %1060
        %vm1063 = vcmask 261120
        %v1065 = vsel %vm1063, %v1035, 0
        %v1068 = vsel %vm1063, %v1036, 0
        %v1071 = vsel %vm1063, %v1037, 0
        %v1074 = vsel %vm1063, %v1038, 0
        %1076 = vmatpush.msra.mxu0 0.0
        %1077 = vmatpush.msra.mxu0 0.0
        %1078 = vmatpush.msra.mxu0 0.0
        %1079 = vmatpush.msra.mxu0 0.0
        %1080 = vmatpush.msra.mxu0 0.0
        %1081 = vmatpush.msra.mxu0 0.0
        %1082 = vmatpush.msra.mxu0 0.0
        %1083 = vmatpush.msra.mxu0 0.0
        %1084 = vmatpush.msra.mxu0 0.0
        %1085 = vmatpush.msra.mxu0 0.0
        %1086 = vmatpush.msra.mxu0 0.0
        %1087 = vmatpush.msra.mxu0 0.0
        %1088 = vmatpush.msra.mxu0 %v1034
        %1089 = vmatpush.msra.mxu0 %v879
        %1090 = vmatpush.msra.mxu0 %v724
        %1091 = vmatpush.msra.mxu0 %v569
        %1092 = vmatmul.f32.gmra.mxu0 %v1065
        %v1093 = vpop.f32.mrf.mxu0
        %v1094 = vadd.f32 %v1046, %v1093
        %1095 = vmatmul.f32.gmra.mxu0 %v1068
        %v1096 = vpop.f32.mrf.mxu0
        %v1097 = vadd.f32 %v1051, %v1096
        %1098 = vmatmul.f32.gmra.mxu0 %v1071
        %v1099 = vpop.f32.mrf.mxu0
        %v1100 = vadd.f32 %v1056, %v1099
        %1101 = vmatmul.f32.gmra.mxu0 %v1074
        %v1102 = vpop.f32.mrf.mxu0
        %v1103 = vadd.f32 %v1061, %v1102
        %1104 = vdwg.mxu0
        %v1105 = vmul.f32 %v1094, 30.0
        %v1106 = vmul.f32 %v1097, 30.0
        %v1107 = vmul.f32 %v1100, 30.0
        %v1108 = vmul.f32 %v1103, 30.0
        %v1109 = vand.u32 2147483647, %v1105
        %vm1110 = vcmp.le.f32.partialorder %v1109, 0.7853982
        %vm1111 = vcmp.lt.s32.totalorder %v1105, 0
        %v1112 = vand.u32 %v1105, 2139095040
        %v1113 = vshrl.u32 %v1112, 23
        %v1114 = vsub.s32 %v1113, 127
        %v1115 = vand.u32 2147483647, %v1105
        %v1116 = vand.u32 %v1115, 8388607
        %v1117 = vor.u32 %v1116, 8388608
        %v1118 = vsub.s32 0, %v1117
        %v1119 = vadd.s32 %v1114, 1
        %vm1120 = vcmp.gt.s32.totalorder %v1119, 0
        %v1121 = vsel %vm1120, %v1119, 0
        %v1122 = vshrl.u32 %v1121, 5
        %v1123 = vand.u32 %v1121, 31
        %v1124 = vsub.s32 32, %v1123
        %v1125 = vshrl.u32 683565275, %v1124
        %v1126 = vshll.u32 683565275, %v1123
        %v1127 = vshrl.u32 2475754826, %v1124
        %v1128 = vor.u32 %v1126, %v1127
        %v1129 = vshll.u32 2475754826, %v1123
        %v1130 = vshrl.u32 2131351028, %v1124
        %v1131 = vor.u32 %v1129, %v1130
        %v1132 = vshll.u32 2131351028, %v1123
        %v1133 = vshrl.u32 2102212464, %v1124
        %v1134 = vor.u32 %v1132, %v1133
        %v1135 = vshll.u32 2102212464, %v1123
        %v1136 = vshrl.u32 920167782, %v1124
        %v1137 = vor.u32 %v1135, %v1136
        %v1138 = vshll.u32 920167782, %v1123
        %v1139 = vshrl.u32 1326507024, %v1124
        %v1140 = vor.u32 %v1138, %v1139
        %vm1141 = vcmp.lt.s32.totalorder %v1122, 1
        %vm1142 = vcmp.lt.s32.totalorder %v1122, 2
        %vm1143 = vcmp.lt.s32.totalorder %v1122, 3
        %vm1144 = vcmp.lt.s32.totalorder %v1122, 4
        %v1145 = vsel %vm1141, %v1125, %v1128
        %v1146 = vsel %vm1144, %v1134, 2102212464
        %v1147 = vsel %vm1143, %v1131, %v1146
        %v1148 = vsel %vm1142, %v1145, %v1147
        %v1149 = vsel %vm1141, %v1128, %v1131
        %v1150 = vsel %vm1144, %v1137, 920167782
        %v1151 = vsel %vm1143, %v1134, %v1150
        %v1152 = vsel %vm1142, %v1149, %v1151
        %v1153 = vsel %vm1141, %v1131, %v1134
        %v1154 = vsel %vm1144, %v1140, 1326507024
        %v1155 = vsel %vm1143, %v1137, %v1154
        %v1156 = vsel %vm1142, %v1153, %v1155
        %v1157 = vshll.u32 %v1117, 8
        %v1158 = vand.u32 %v1157, 65535
        %v1159 = vshrl.u32 %v1157, 16
        %v1160 = vand.u32 %v1156, 65535
        %v1161 = vshrl.u32 %v1156, 16
        %v1162 = vmul.u32 %v1158, %v1160
        %v1163 = vmul.u32 %v1158, %v1161
        %v1164 = vmul.u32 %v1159, %v1160
        %v1165 = vmul.u32 %v1159, %v1161
        %v1166 = vshll.u32 %v1163, 16
        %v1167 = vshrl.u32 %v1163, 16
        %v1168 = vshll.u32 %v1164, 16
        %v1169 = vshrl.u32 %v1164, 16
        %vm1170 = vc.u32 %v1162, %v1166
        %v1171 = vsel %vm1170, 1, 0
        %v1172 = vadd.s32 %v1162, %v1166
        %v1173 = vadd.s32 %v1165, %v1171
        %vm1174 = vc.u32 %v1172, %v1168
        %v1175 = vsel %vm1174, 1, 0
        %v1176 = vadd.s32 %v1172, %v1168
        %v1177 = vadd.s32 %v1173, %v1175
        %v1178 = vadd.s32 %v1177, %v1167
        %v1179 = vadd.s32 %v1178, %v1169
        %v1180 = vand.u32 %v1157, 65535
        %v1181 = vshrl.u32 %v1157, 16
        %v1182 = vand.u32 %v1152, 65535
        %v1183 = vshrl.u32 %v1152, 16
        %v1184 = vmul.u32 %v1180, %v1182
        %v1185 = vmul.u32 %v1180, %v1183
        %v1186 = vmul.u32 %v1181, %v1182
        %v1187 = vmul.u32 %v1181, %v1183
        %v1188 = vshll.u32 %v1185, 16
        %v1189 = vshrl.u32 %v1185, 16
        %v1190 = vshll.u32 %v1186, 16
        %v1191 = vshrl.u32 %v1186, 16
        %vm1192 = vc.u32 %v1184, %v1188
        %v1193 = vsel %vm1192, 1, 0
        %v1194 = vadd.s32 %v1184, %v1188
        %v1195 = vadd.s32 %v1187, %v1193
        %vm1196 = vc.u32 %v1194, %v1190
        %v1197 = vsel %vm1196, 1, 0
        %v1198 = vadd.s32 %v1194, %v1190
        %v1199 = vadd.s32 %v1195, %v1197
        %v1200 = vadd.s32 %v1199, %v1189
        %v1201 = vadd.s32 %v1200, %v1191
        %v1202 = vmul.u32 %v1157, %v1148
        %v1203 = vadd.s32 %v1179, %v1198
        %vm1204 = vc.u32 %v1179, %v1198
        %v1205 = vadd.s32 %v1201, 1
        %v1206 = vsel %vm1204, %v1205, %v1201
        %v1207 = vadd.s32 %v1202, %v1206
        %v1208 = vadd.s32 %v1207, 536870912
        %v1209 = vshrl.u32 %v1208, 30
        %v1210 = vshll.u32 %v1209, 30
        %v1211 = vsub.s32 %v1207, %v1210
        %vm1212 = vcmp.lt.s32.totalorder %v1211, 0
        %v1213 = vsub.s32 0, %v1211
        %v1214 = vsel %vm1212, %v1213, %v1211
        %v1215 = vclz %v1214
        %v1216 = vsub.s32 %v1215, 2
        %vm1217 = vcmp.gt.s32.totalorder 0, %v1216
        %v1218 = vsel %vm1217, 0, %v1216
        %v1219 = vsub.s32 32, %v1218
        %v1220 = vshll.u32 %v1211, %v1218
        %v1221 = vshrl.u32 %v1203, %v1219
        %v1222 = vor.u32 %v1220, %v1221
        %v1223 = vsub.s32 4294967266, %v1218
        %v1224 = vadd.s32 %v1223, 127
        %v1225 = vshll.u32 %v1224, 23
        %v1226 = vor.u32 4788187, %v1225
        %v1227 = vand.u32 2147483647, %v1226
        %v1229 = vcvt.s32.f32 %v1222
        %v1230 = vmul.f32 %v1229, %v1227
        %v1231 = vxor.u32 %v1230, 2147483648
        %v1232 = vsel %vm1111, %v1231, %v1230
        %v1233 = vsub.s32 4, %v1209
        %v1234 = vsel %vm1111, %v1233, %v1209
        %v1235 = vsel %vm1110, %v1105, %v1232
        %v1236 = vsel %vm1110, 0, %v1234
        %v1237 = vmul.f32 %v1235, %v1235
        %v1238 = vmul.f32 %v1237, -0.001358992
        %v1239 = vadd.f32 %v1238, 0.041655596
        %v1240 = vmul.f32 %v1237, %v1239
        %v1241 = vadd.f32 %v1240, -0.4999988
        %v1242 = vmul.f32 %v1237, %v1241
        %v1243 = vadd.f32 1.0, %v1242
        %v1244 = vmul.f32 %v1235, %v1235
        %v1245 = vmul.f32 %v1244, -0.00019511016
        %v1246 = vadd.f32 %v1245, 0.008332121
        %v1247 = vmul.f32 %v1244, %v1246
        %v1248 = vadd.f32 %v1247, -0.16666654
        %v1249 = vmul.f32 %v1244, %v1248
        %v1250 = vadd.f32 %v1249, 1.0
        %v1251 = vmul.f32 %v1250, %v1235
        %vm1252 = vweird.f32 %v1105
        %v1253 = vadd.s32 %v1236, 3
        %v1254 = vand.u32 %v1253, 3
        %vm1255 = vcmp.lt.s32.totalorder %v1254, 2
        %vm1256 = vcmp.eq.s32.totalorder %v1254, 0
        %v1257 = vxor.u32 %v1251, 2147483648
        %v1258 = vsel %vm1256, %v1243, %v1257
        %vm1259 = vcmp.eq.s32.totalorder %v1254, 2
        %v1260 = vxor.u32 %v1243, 2147483648
        %v1261 = vsel %vm1259, %v1260, %v1251
        %v1262 = vsel %vm1255, %v1258, %v1261
        %v1263 = vsel %vm1252, nan, %v1262
        %v1264 = vand.u32 2147483647, %v1106
        %vm1265 = vcmp.le.f32.partialorder %v1264, 0.7853982
        %vm1266 = vcmp.lt.s32.totalorder %v1106, 0
        %v1267 = vand.u32 %v1106, 2139095040
        %v1268 = vshrl.u32 %v1267, 23
        %v1269 = vsub.s32 %v1268, 127
        %v1270 = vand.u32 2147483647, %v1106
        %v1271 = vand.u32 %v1270, 8388607
        %v1272 = vor.u32 %v1271, 8388608
        %v1273 = vsub.s32 0, %v1272
        %v1274 = vadd.s32 %v1269, 1
        %vm1275 = vcmp.gt.s32.totalorder %v1274, 0
        %v1276 = vsel %vm1275, %v1274, 0
        %v1277 = vshrl.u32 %v1276, 5
        %v1278 = vand.u32 %v1276, 31
        %v1279 = vsub.s32 32, %v1278
        %v1280 = vshrl.u32 683565275, %v1279
        %v1281 = vshll.u32 683565275, %v1278
        %v1282 = vshrl.u32 2475754826, %v1279
        %v1283 = vor.u32 %v1281, %v1282
        %v1284 = vshll.u32 2475754826, %v1278
        %v1285 = vshrl.u32 2131351028, %v1279
        %v1286 = vor.u32 %v1284, %v1285
        %v1287 = vshll.u32 2131351028, %v1278
        %v1288 = vshrl.u32 2102212464, %v1279
        %v1289 = vor.u32 %v1287, %v1288
        %v1290 = vshll.u32 2102212464, %v1278
        %v1291 = vshrl.u32 920167782, %v1279
        %v1292 = vor.u32 %v1290, %v1291
        %v1293 = vshll.u32 920167782, %v1278
        %v1294 = vshrl.u32 1326507024, %v1279
        %v1295 = vor.u32 %v1293, %v1294
        %vm1296 = vcmp.lt.s32.totalorder %v1277, 1
        %vm1297 = vcmp.lt.s32.totalorder %v1277, 2
        %vm1298 = vcmp.lt.s32.totalorder %v1277, 3
        %vm1299 = vcmp.lt.s32.totalorder %v1277, 4
        %v1300 = vsel %vm1296, %v1280, %v1283
        %v1301 = vsel %vm1299, %v1289, 2102212464
        %v1302 = vsel %vm1298, %v1286, %v1301
        %v1303 = vsel %vm1297, %v1300, %v1302
        %v1304 = vsel %vm1296, %v1283, %v1286
        %v1305 = vsel %vm1299, %v1292, 920167782
        %v1306 = vsel %vm1298, %v1289, %v1305
        %v1307 = vsel %vm1297, %v1304, %v1306
        %v1308 = vsel %vm1296, %v1286, %v1289
        %v1309 = vsel %vm1299, %v1295, 1326507024
        %v1310 = vsel %vm1298, %v1292, %v1309
        %v1311 = vsel %vm1297, %v1308, %v1310
        %v1312 = vshll.u32 %v1272, 8
        %v1313 = vand.u32 %v1312, 65535
        %v1314 = vshrl.u32 %v1312, 16
        %v1315 = vand.u32 %v1311, 65535
        %v1316 = vshrl.u32 %v1311, 16
        %v1317 = vmul.u32 %v1313, %v1315
        %v1318 = vmul.u32 %v1313, %v1316
        %v1319 = vmul.u32 %v1314, %v1315
        %v1320 = vmul.u32 %v1314, %v1316
        %v1321 = vshll.u32 %v1318, 16
        %v1322 = vshrl.u32 %v1318, 16
        %v1323 = vshll.u32 %v1319, 16
        %v1324 = vshrl.u32 %v1319, 16
        %vm1325 = vc.u32 %v1317, %v1321
        %v1326 = vsel %vm1325, 1, 0
        %v1327 = vadd.s32 %v1317, %v1321
        %v1328 = vadd.s32 %v1320, %v1326
        %vm1329 = vc.u32 %v1327, %v1323
        %v1330 = vsel %vm1329, 1, 0
        %v1331 = vadd.s32 %v1327, %v1323
        %v1332 = vadd.s32 %v1328, %v1330
        %v1333 = vadd.s32 %v1332, %v1322
        %v1334 = vadd.s32 %v1333, %v1324
        %v1335 = vand.u32 %v1312, 65535
        %v1336 = vshrl.u32 %v1312, 16
        %v1337 = vand.u32 %v1307, 65535
        %v1338 = vshrl.u32 %v1307, 16
        %v1339 = vmul.u32 %v1335, %v1337
        %v1340 = vmul.u32 %v1335, %v1338
        %v1341 = vmul.u32 %v1336, %v1337
        %v1342 = vmul.u32 %v1336, %v1338
        %v1343 = vshll.u32 %v1340, 16
        %v1344 = vshrl.u32 %v1340, 16
        %v1345 = vshll.u32 %v1341, 16
        %v1346 = vshrl.u32 %v1341, 16
        %vm1347 = vc.u32 %v1339, %v1343
        %v1348 = vsel %vm1347, 1, 0
        %v1349 = vadd.s32 %v1339, %v1343
        %v1350 = vadd.s32 %v1342, %v1348
        %vm1351 = vc.u32 %v1349, %v1345
        %v1352 = vsel %vm1351, 1, 0
        %v1353 = vadd.s32 %v1349, %v1345
        %v1354 = vadd.s32 %v1350, %v1352
        %v1355 = vadd.s32 %v1354, %v1344
        %v1356 = vadd.s32 %v1355, %v1346
        %v1357 = vmul.u32 %v1312, %v1303
        %v1358 = vadd.s32 %v1334, %v1353
        %vm1359 = vc.u32 %v1334, %v1353
        %v1360 = vadd.s32 %v1356, 1
        %v1361 = vsel %vm1359, %v1360, %v1356
        %v1362 = vadd.s32 %v1357, %v1361
        %v1363 = vadd.s32 %v1362, 536870912
        %v1364 = vshrl.u32 %v1363, 30
        %v1365 = vshll.u32 %v1364, 30
        %v1366 = vsub.s32 %v1362, %v1365
        %vm1367 = vcmp.lt.s32.totalorder %v1366, 0
        %v1368 = vsub.s32 0, %v1366
        %v1369 = vsel %vm1367, %v1368, %v1366
        %v1370 = vclz %v1369
        %v1371 = vsub.s32 %v1370, 2
        %vm1372 = vcmp.gt.s32.totalorder 0, %v1371
        %v1373 = vsel %vm1372, 0, %v1371
        %v1374 = vsub.s32 32, %v1373
        %v1375 = vshll.u32 %v1366, %v1373
        %v1376 = vshrl.u32 %v1358, %v1374
        %v1377 = vor.u32 %v1375, %v1376
        %v1378 = vsub.s32 4294967266, %v1373
        %v1379 = vadd.s32 %v1378, 127
        %v1380 = vshll.u32 %v1379, 23
        %v1381 = vor.u32 4788187, %v1380
        %v1382 = vand.u32 2147483647, %v1381
        %v1384 = vcvt.s32.f32 %v1377
        %v1385 = vmul.f32 %v1384, %v1382
        %v1386 = vxor.u32 %v1385, 2147483648
        %v1387 = vsel %vm1266, %v1386, %v1385
        %v1388 = vsub.s32 4, %v1364
        %v1389 = vsel %vm1266, %v1388, %v1364
        %v1390 = vsel %vm1265, %v1106, %v1387
        %v1391 = vsel %vm1265, 0, %v1389
        %v1392 = vmul.f32 %v1390, %v1390
        %v1393 = vmul.f32 %v1392, -0.001358992
        %v1394 = vadd.f32 %v1393, 0.041655596
        %v1395 = vmul.f32 %v1392, %v1394
        %v1396 = vadd.f32 %v1395, -0.4999988
        %v1397 = vmul.f32 %v1392, %v1396
        %v1398 = vadd.f32 1.0, %v1397
        %v1399 = vmul.f32 %v1390, %v1390
        %v1400 = vmul.f32 %v1399, -0.00019511016
        %v1401 = vadd.f32 %v1400, 0.008332121
        %v1402 = vmul.f32 %v1399, %v1401
        %v1403 = vadd.f32 %v1402, -0.16666654
        %v1404 = vmul.f32 %v1399, %v1403
        %v1405 = vadd.f32 %v1404, 1.0
        %v1406 = vmul.f32 %v1405, %v1390
        %vm1407 = vweird.f32 %v1106
        %v1408 = vadd.s32 %v1391, 3
        %v1409 = vand.u32 %v1408, 3
        %vm1410 = vcmp.lt.s32.totalorder %v1409, 2
        %vm1411 = vcmp.eq.s32.totalorder %v1409, 0
        %v1412 = vxor.u32 %v1406, 2147483648
        %v1413 = vsel %vm1411, %v1398, %v1412
        %vm1414 = vcmp.eq.s32.totalorder %v1409, 2
        %v1415 = vxor.u32 %v1398, 2147483648
        %v1416 = vsel %vm1414, %v1415, %v1406
        %v1417 = vsel %vm1410, %v1413, %v1416
        %v1418 = vsel %vm1407, nan, %v1417
        %v1419 = vand.u32 2147483647, %v1107
        %vm1420 = vcmp.le.f32.partialorder %v1419, 0.7853982
        %vm1421 = vcmp.lt.s32.totalorder %v1107, 0
        %v1422 = vand.u32 %v1107, 2139095040
        %v1423 = vshrl.u32 %v1422, 23
        %v1424 = vsub.s32 %v1423, 127
        %v1425 = vand.u32 2147483647, %v1107
        %v1426 = vand.u32 %v1425, 8388607
        %v1427 = vor.u32 %v1426, 8388608
        %v1428 = vsub.s32 0, %v1427
        %v1429 = vadd.s32 %v1424, 1
        %vm1430 = vcmp.gt.s32.totalorder %v1429, 0
        %v1431 = vsel %vm1430, %v1429, 0
        %v1432 = vshrl.u32 %v1431, 5
        %v1433 = vand.u32 %v1431, 31
        %v1434 = vsub.s32 32, %v1433
        %v1435 = vshrl.u32 683565275, %v1434
        %v1436 = vshll.u32 683565275, %v1433
        %v1437 = vshrl.u32 2475754826, %v1434
        %v1438 = vor.u32 %v1436, %v1437
        %v1439 = vshll.u32 2475754826, %v1433
        %v1440 = vshrl.u32 2131351028, %v1434
        %v1441 = vor.u32 %v1439, %v1440
        %v1442 = vshll.u32 2131351028, %v1433
        %v1443 = vshrl.u32 2102212464, %v1434
        %v1444 = vor.u32 %v1442, %v1443
        %v1445 = vshll.u32 2102212464, %v1433
        %v1446 = vshrl.u32 920167782, %v1434
        %v1447 = vor.u32 %v1445, %v1446
        %v1448 = vshll.u32 920167782, %v1433
        %v1449 = vshrl.u32 1326507024, %v1434
        %v1450 = vor.u32 %v1448, %v1449
        %vm1451 = vcmp.lt.s32.totalorder %v1432, 1
        %vm1452 = vcmp.lt.s32.totalorder %v1432, 2
        %vm1453 = vcmp.lt.s32.totalorder %v1432, 3
        %vm1454 = vcmp.lt.s32.totalorder %v1432, 4
        %v1455 = vsel %vm1451, %v1435, %v1438
        %v1456 = vsel %vm1454, %v1444, 2102212464
        %v1457 = vsel %vm1453, %v1441, %v1456
        %v1458 = vsel %vm1452, %v1455, %v1457
        %v1459 = vsel %vm1451, %v1438, %v1441
        %v1460 = vsel %vm1454, %v1447, 920167782
        %v1461 = vsel %vm1453, %v1444, %v1460
        %v1462 = vsel %vm1452, %v1459, %v1461
        %v1463 = vsel %vm1451, %v1441, %v1444
        %v1464 = vsel %vm1454, %v1450, 1326507024
        %v1465 = vsel %vm1453, %v1447, %v1464
        %v1466 = vsel %vm1452, %v1463, %v1465
        %v1467 = vshll.u32 %v1427, 8
        %v1468 = vand.u32 %v1467, 65535
        %v1469 = vshrl.u32 %v1467, 16
        %v1470 = vand.u32 %v1466, 65535
        %v1471 = vshrl.u32 %v1466, 16
        %v1472 = vmul.u32 %v1468, %v1470
        %v1473 = vmul.u32 %v1468, %v1471
        %v1474 = vmul.u32 %v1469, %v1470
        %v1475 = vmul.u32 %v1469, %v1471
        %v1476 = vshll.u32 %v1473, 16
        %v1477 = vshrl.u32 %v1473, 16
        %v1478 = vshll.u32 %v1474, 16
        %v1479 = vshrl.u32 %v1474, 16
        %vm1480 = vc.u32 %v1472, %v1476
        %v1481 = vsel %vm1480, 1, 0
        %v1482 = vadd.s32 %v1472, %v1476
        %v1483 = vadd.s32 %v1475, %v1481
        %vm1484 = vc.u32 %v1482, %v1478
        %v1485 = vsel %vm1484, 1, 0
        %v1486 = vadd.s32 %v1482, %v1478
        %v1487 = vadd.s32 %v1483, %v1485
        %v1488 = vadd.s32 %v1487, %v1477
        %v1489 = vadd.s32 %v1488, %v1479
        %v1490 = vand.u32 %v1467, 65535
        %v1491 = vshrl.u32 %v1467, 16
        %v1492 = vand.u32 %v1462, 65535
        %v1493 = vshrl.u32 %v1462, 16
        %v1494 = vmul.u32 %v1490, %v1492
        %v1495 = vmul.u32 %v1490, %v1493
        %v1496 = vmul.u32 %v1491, %v1492
        %v1497 = vmul.u32 %v1491, %v1493
        %v1498 = vshll.u32 %v1495, 16
        %v1499 = vshrl.u32 %v1495, 16
        %v1500 = vshll.u32 %v1496, 16
        %v1501 = vshrl.u32 %v1496, 16
        %vm1502 = vc.u32 %v1494, %v1498
        %v1503 = vsel %vm1502, 1, 0
        %v1504 = vadd.s32 %v1494, %v1498
        %v1505 = vadd.s32 %v1497, %v1503
        %vm1506 = vc.u32 %v1504, %v1500
        %v1507 = vsel %vm1506, 1, 0
        %v1508 = vadd.s32 %v1504, %v1500
        %v1509 = vadd.s32 %v1505, %v1507
        %v1510 = vadd.s32 %v1509, %v1499
        %v1511 = vadd.s32 %v1510, %v1501
        %v1512 = vmul.u32 %v1467, %v1458
        %v1513 = vadd.s32 %v1489, %v1508
        %vm1514 = vc.u32 %v1489, %v1508
        %v1515 = vadd.s32 %v1511, 1
        %v1516 = vsel %vm1514, %v1515, %v1511
        %v1517 = vadd.s32 %v1512, %v1516
        %v1518 = vadd.s32 %v1517, 536870912
        %v1519 = vshrl.u32 %v1518, 30
        %v1520 = vshll.u32 %v1519, 30
        %v1521 = vsub.s32 %v1517, %v1520
        %vm1522 = vcmp.lt.s32.totalorder %v1521, 0
        %v1523 = vsub.s32 0, %v1521
        %v1524 = vsel %vm1522, %v1523, %v1521
        %v1525 = vclz %v1524
        %v1526 = vsub.s32 %v1525, 2
        %vm1527 = vcmp.gt.s32.totalorder 0, %v1526
        %v1528 = vsel %vm1527, 0, %v1526
        %v1529 = vsub.s32 32, %v1528
        %v1530 = vshll.u32 %v1521, %v1528
        %v1531 = vshrl.u32 %v1513, %v1529
        %v1532 = vor.u32 %v1530, %v1531
        %v1533 = vsub.s32 4294967266, %v1528
        %v1534 = vadd.s32 %v1533, 127
        %v1535 = vshll.u32 %v1534, 23
        %v1536 = vor.u32 4788187, %v1535
        %v1537 = vand.u32 2147483647, %v1536
        %v1539 = vcvt.s32.f32 %v1532
        %v1540 = vmul.f32 %v1539, %v1537
        %v1541 = vxor.u32 %v1540, 2147483648
        %v1542 = vsel %vm1421, %v1541, %v1540
        %v1543 = vsub.s32 4, %v1519
        %v1544 = vsel %vm1421, %v1543, %v1519
        %v1545 = vsel %vm1420, %v1107, %v1542
        %v1546 = vsel %vm1420, 0, %v1544
        %v1547 = vmul.f32 %v1545, %v1545
        %v1548 = vmul.f32 %v1547, -0.001358992
        %v1549 = vadd.f32 %v1548, 0.041655596
        %v1550 = vmul.f32 %v1547, %v1549
        %v1551 = vadd.f32 %v1550, -0.4999988
        %v1552 = vmul.f32 %v1547, %v1551
        %v1553 = vadd.f32 1.0, %v1552
        %v1554 = vmul.f32 %v1545, %v1545
        %v1555 = vmul.f32 %v1554, -0.00019511016
        %v1556 = vadd.f32 %v1555, 0.008332121
        %v1557 = vmul.f32 %v1554, %v1556
        %v1558 = vadd.f32 %v1557, -0.16666654
        %v1559 = vmul.f32 %v1554, %v1558
        %v1560 = vadd.f32 %v1559, 1.0
        %v1561 = vmul.f32 %v1560, %v1545
        %vm1562 = vweird.f32 %v1107
        %v1563 = vadd.s32 %v1546, 3
        %v1564 = vand.u32 %v1563, 3
        %vm1565 = vcmp.lt.s32.totalorder %v1564, 2
        %vm1566 = vcmp.eq.s32.totalorder %v1564, 0
        %v1567 = vxor.u32 %v1561, 2147483648
        %v1568 = vsel %vm1566, %v1553, %v1567
        %vm1569 = vcmp.eq.s32.totalorder %v1564, 2
        %v1570 = vxor.u32 %v1553, 2147483648
        %v1571 = vsel %vm1569, %v1570, %v1561
        %v1572 = vsel %vm1565, %v1568, %v1571
        %v1573 = vsel %vm1562, nan, %v1572
        %v1574 = vand.u32 2147483647, %v1108
        %vm1575 = vcmp.le.f32.partialorder %v1574, 0.7853982
        %vm1576 = vcmp.lt.s32.totalorder %v1108, 0
        %v1577 = vand.u32 %v1108, 2139095040
        %v1578 = vshrl.u32 %v1577, 23
        %v1579 = vsub.s32 %v1578, 127
        %v1580 = vand.u32 2147483647, %v1108
        %v1581 = vand.u32 %v1580, 8388607
        %v1582 = vor.u32 %v1581, 8388608
        %v1583 = vsub.s32 0, %v1582
        %v1584 = vadd.s32 %v1579, 1
        %vm1585 = vcmp.gt.s32.totalorder %v1584, 0
        %v1586 = vsel %vm1585, %v1584, 0
        %v1587 = vshrl.u32 %v1586, 5
        %v1588 = vand.u32 %v1586, 31
        %v1589 = vsub.s32 32, %v1588
        %v1590 = vshrl.u32 683565275, %v1589
        %v1591 = vshll.u32 683565275, %v1588
        %v1592 = vshrl.u32 2475754826, %v1589
        %v1593 = vor.u32 %v1591, %v1592
        %v1594 = vshll.u32 2475754826, %v1588
        %v1595 = vshrl.u32 2131351028, %v1589
        %v1596 = vor.u32 %v1594, %v1595
        %v1597 = vshll.u32 2131351028, %v1588
        %v1598 = vshrl.u32 2102212464, %v1589
        %v1599 = vor.u32 %v1597, %v1598
        %v1600 = vshll.u32 2102212464, %v1588
        %v1601 = vshrl.u32 920167782, %v1589
        %v1602 = vor.u32 %v1600, %v1601
        %v1603 = vshll.u32 920167782, %v1588
        %v1604 = vshrl.u32 1326507024, %v1589
        %v1605 = vor.u32 %v1603, %v1604
        %vm1606 = vcmp.lt.s32.totalorder %v1587, 1
        %vm1607 = vcmp.lt.s32.totalorder %v1587, 2
        %vm1608 = vcmp.lt.s32.totalorder %v1587, 3
        %vm1609 = vcmp.lt.s32.totalorder %v1587, 4
        %v1610 = vsel %vm1606, %v1590, %v1593
        %v1611 = vsel %vm1609, %v1599, 2102212464
        %v1612 = vsel %vm1608, %v1596, %v1611
        %v1613 = vsel %vm1607, %v1610, %v1612
        %v1614 = vsel %vm1606, %v1593, %v1596
        %v1615 = vsel %vm1609, %v1602, 920167782
        %v1616 = vsel %vm1608, %v1599, %v1615
        %v1617 = vsel %vm1607, %v1614, %v1616
        %v1618 = vsel %vm1606, %v1596, %v1599
        %v1619 = vsel %vm1609, %v1605, 1326507024
        %v1620 = vsel %vm1608, %v1602, %v1619
        %v1621 = vsel %vm1607, %v1618, %v1620
        %v1622 = vshll.u32 %v1582, 8
        %v1623 = vand.u32 %v1622, 65535
        %v1624 = vshrl.u32 %v1622, 16
        %v1625 = vand.u32 %v1621, 65535
        %v1626 = vshrl.u32 %v1621, 16
        %v1627 = vmul.u32 %v1623, %v1625
        %v1628 = vmul.u32 %v1623, %v1626
        %v1629 = vmul.u32 %v1624, %v1625
        %v1630 = vmul.u32 %v1624, %v1626
        %v1631 = vshll.u32 %v1628, 16
        %v1632 = vshrl.u32 %v1628, 16
        %v1633 = vshll.u32 %v1629, 16
        %v1634 = vshrl.u32 %v1629, 16
        %vm1635 = vc.u32 %v1627, %v1631
        %v1636 = vsel %vm1635, 1, 0
        %v1637 = vadd.s32 %v1627, %v1631
        %v1638 = vadd.s32 %v1630, %v1636
        %vm1639 = vc.u32 %v1637, %v1633
        %v1640 = vsel %vm1639, 1, 0
        %v1641 = vadd.s32 %v1637, %v1633
        %v1642 = vadd.s32 %v1638, %v1640
        %v1643 = vadd.s32 %v1642, %v1632
        %v1644 = vadd.s32 %v1643, %v1634
        %v1645 = vand.u32 %v1622, 65535
        %v1646 = vshrl.u32 %v1622, 16
        %v1647 = vand.u32 %v1617, 65535
        %v1648 = vshrl.u32 %v1617, 16
        %v1649 = vmul.u32 %v1645, %v1647
        %v1650 = vmul.u32 %v1645, %v1648
        %v1651 = vmul.u32 %v1646, %v1647
        %v1652 = vmul.u32 %v1646, %v1648
        %v1653 = vshll.u32 %v1650, 16
        %v1654 = vshrl.u32 %v1650, 16
        %v1655 = vshll.u32 %v1651, 16
        %v1656 = vshrl.u32 %v1651, 16
        %vm1657 = vc.u32 %v1649, %v1653
        %v1658 = vsel %vm1657, 1, 0
        %v1659 = vadd.s32 %v1649, %v1653
        %v1660 = vadd.s32 %v1652, %v1658
        %vm1661 = vc.u32 %v1659, %v1655
        %v1662 = vsel %vm1661, 1, 0
        %v1663 = vadd.s32 %v1659, %v1655
        %v1664 = vadd.s32 %v1660, %v1662
        %v1665 = vadd.s32 %v1664, %v1654
        %v1666 = vadd.s32 %v1665, %v1656
        %v1667 = vmul.u32 %v1622, %v1613
        %v1668 = vadd.s32 %v1644, %v1663
        %vm1669 = vc.u32 %v1644, %v1663
        %v1670 = vadd.s32 %v1666, 1
        %v1671 = vsel %vm1669, %v1670, %v1666
        %v1672 = vadd.s32 %v1667, %v1671
        %v1673 = vadd.s32 %v1672, 536870912
        %v1674 = vshrl.u32 %v1673, 30
        %v1675 = vshll.u32 %v1674, 30
        %v1676 = vsub.s32 %v1672, %v1675
        %vm1677 = vcmp.lt.s32.totalorder %v1676, 0
        %v1678 = vsub.s32 0, %v1676
        %v1679 = vsel %vm1677, %v1678, %v1676
        %v1680 = vclz %v1679
        %v1681 = vsub.s32 %v1680, 2
        %vm1682 = vcmp.gt.s32.totalorder 0, %v1681
        %v1683 = vsel %vm1682, 0, %v1681
        %v1684 = vsub.s32 32, %v1683
        %v1685 = vshll.u32 %v1676, %v1683
        %v1686 = vshrl.u32 %v1668, %v1684
        %v1687 = vor.u32 %v1685, %v1686
        %v1688 = vsub.s32 4294967266, %v1683
        %v1689 = vadd.s32 %v1688, 127
        %v1690 = vshll.u32 %v1689, 23
        %v1691 = vor.u32 4788187, %v1690
        %v1692 = vand.u32 2147483647, %v1691
        %v1694 = vcvt.s32.f32 %v1687
        %v1695 = vmul.f32 %v1694, %v1692
        %v1696 = vxor.u32 %v1695, 2147483648
        %v1697 = vsel %vm1576, %v1696, %v1695
        %v1698 = vsub.s32 4, %v1674
        %v1699 = vsel %vm1576, %v1698, %v1674
        %v1700 = vsel %vm1575, %v1108, %v1697
        %v1701 = vsel %vm1575, 0, %v1699
        %v1702 = vmul.f32 %v1700, %v1700
        %v1703 = vmul.f32 %v1702, -0.001358992
        %v1704 = vadd.f32 %v1703, 0.041655596
        %v1705 = vmul.f32 %v1702, %v1704
        %v1706 = vadd.f32 %v1705, -0.4999988
        %v1707 = vmul.f32 %v1702, %v1706
        %v1708 = vadd.f32 1.0, %v1707
        %v1709 = vmul.f32 %v1700, %v1700
        %v1710 = vmul.f32 %v1709, -0.00019511016
        %v1711 = vadd.f32 %v1710, 0.008332121
        %v1712 = vmul.f32 %v1709, %v1711
        %v1713 = vadd.f32 %v1712, -0.16666654
        %v1714 = vmul.f32 %v1709, %v1713
        %v1715 = vadd.f32 %v1714, 1.0
        %v1716 = vmul.f32 %v1715, %v1700
        %vm1717 = vweird.f32 %v1108
        %v1718 = vadd.s32 %v1701, 3
        %v1719 = vand.u32 %v1718, 3
        %vm1720 = vcmp.lt.s32.totalorder %v1719, 2
        %vm1721 = vcmp.eq.s32.totalorder %v1719, 0
        %v1722 = vxor.u32 %v1716, 2147483648
        %v1723 = vsel %vm1721, %v1708, %v1722
        %vm1724 = vcmp.eq.s32.totalorder %v1719, 2
        %v1725 = vxor.u32 %v1708, 2147483648
        %v1726 = vsel %vm1724, %v1725, %v1716
        %v1727 = vsel %vm1720, %v1723, %v1726
        %v1728 = vsel %vm1717, nan, %v1727
        %v1729 = vld [vmem:[%s5] sm:$0xff]
        %v1730 = vld [vmem:[%s5 + $0x8] sm:$0xff]
        %v1731 = vld [vmem:[%s5 + $0x10] sm:$0xff]
        %v1732 = vld [vmem:[%s5 + $0x18] sm:$0xff]
        %v1733 = vld [vmem:[%s6] sm:$0xff]
        %v1734 = vld [vmem:[%s6 + $0x8] sm:$0xff]
        %v1735 = vld [vmem:[%s6 + $0x10] sm:$0xff]
        %v1736 = vld [vmem:[%s6 + $0x18] sm:$0xff]
        %1738 = vset.pattern.permute.xlu0 0
        %1739 = vperm.xlu0 %1738, %v1733
        %v1740 = vpop.permute.xlu0 %1739
        %1743 = vset.pattern.permute.xlu0 0
        %1744 = vperm.xlu0 %1743, %v1734
        %v1745 = vpop.permute.xlu0 %1744
        %1748 = vset.pattern.permute.xlu0 0
        %1749 = vperm.xlu0 %1748, %v1735
        %v1750 = vpop.permute.xlu0 %1749
        %1753 = vset.pattern.permute.xlu0 0
        %1754 = vperm.xlu0 %1753, %v1736
        %v1755 = vpop.permute.xlu0 %1754
        %v1758 = vsel %vm1063, %v1729, 0
        %v1761 = vsel %vm1063, %v1730, 0
        %v1764 = vsel %vm1063, %v1731, 0
        %v1767 = vsel %vm1063, %v1732, 0
        %1769 = vmatpush.msra.mxu0 0.0
        %1770 = vmatpush.msra.mxu0 0.0
        %1771 = vmatpush.msra.mxu0 0.0
        %1772 = vmatpush.msra.mxu0 0.0
        %1773 = vmatpush.msra.mxu0 0.0
        %1774 = vmatpush.msra.mxu0 0.0
        %1775 = vmatpush.msra.mxu0 0.0
        %1776 = vmatpush.msra.mxu0 0.0
        %1777 = vmatpush.msra.mxu0 0.0
        %1778 = vmatpush.msra.mxu0 0.0
        %1779 = vmatpush.msra.mxu0 0.0
        %1780 = vmatpush.msra.mxu0 0.0
        %1781 = vmatpush.msra.mxu0 %v1728
        %1782 = vmatpush.msra.mxu0 %v1573
        %1783 = vmatpush.msra.mxu0 %v1418
        %1784 = vmatpush.msra.mxu0 %v1263
        %1785 = vmatmul.f32.gmra.mxu0 %v1758
        %v1786 = vpop.f32.mrf.mxu0
        %v1787 = vadd.f32 %v1740, %v1786
        %1788 = vmatmul.f32.gmra.mxu0 %v1761
        %v1789 = vpop.f32.mrf.mxu0
        %v1790 = vadd.f32 %v1745, %v1789
        %1791 = vmatmul.f32.gmra.mxu0 %v1764
        %v1792 = vpop.f32.mrf.mxu0
        %v1793 = vadd.f32 %v1750, %v1792
        %1794 = vmatmul.f32.gmra.mxu0 %v1767
        %v1795 = vpop.f32.mrf.mxu0
        %v1796 = vadd.f32 %v1755, %v1795
        %1797 = vdwg.mxu0
        %v1798 = vmul.f32 %v1787, 30.0
        %v1799 = vmul.f32 %v1790, 30.0
        %v1800 = vmul.f32 %v1793, 30.0
        %v1801 = vmul.f32 %v1796, 30.0
        %v1802 = vand.u32 2147483647, %v1798
        %vm1803 = vcmp.le.f32.partialorder %v1802, 0.7853982
        %vm1804 = vcmp.lt.s32.totalorder %v1798, 0
        %v1805 = vand.u32 %v1798, 2139095040
        %v1806 = vshrl.u32 %v1805, 23
        %v1807 = vsub.s32 %v1806, 127
        %v1808 = vand.u32 2147483647, %v1798
        %v1809 = vand.u32 %v1808, 8388607
        %v1810 = vor.u32 %v1809, 8388608
        %v1811 = vsub.s32 0, %v1810
        %v1812 = vadd.s32 %v1807, 1
        %vm1813 = vcmp.gt.s32.totalorder %v1812, 0
        %v1814 = vsel %vm1813, %v1812, 0
        %v1815 = vshrl.u32 %v1814, 5
        %v1816 = vand.u32 %v1814, 31
        %v1817 = vsub.s32 32, %v1816
        %v1818 = vshrl.u32 683565275, %v1817
        %v1819 = vshll.u32 683565275, %v1816
        %v1820 = vshrl.u32 2475754826, %v1817
        %v1821 = vor.u32 %v1819, %v1820
        %v1822 = vshll.u32 2475754826, %v1816
        %v1823 = vshrl.u32 2131351028, %v1817
        %v1824 = vor.u32 %v1822, %v1823
        %v1825 = vshll.u32 2131351028, %v1816
        %v1826 = vshrl.u32 2102212464, %v1817
        %v1827 = vor.u32 %v1825, %v1826
        %v1828 = vshll.u32 2102212464, %v1816
        %v1829 = vshrl.u32 920167782, %v1817
        %v1830 = vor.u32 %v1828, %v1829
        %v1831 = vshll.u32 920167782, %v1816
        %v1832 = vshrl.u32 1326507024, %v1817
        %v1833 = vor.u32 %v1831, %v1832
        %vm1834 = vcmp.lt.s32.totalorder %v1815, 1
        %vm1835 = vcmp.lt.s32.totalorder %v1815, 2
        %vm1836 = vcmp.lt.s32.totalorder %v1815, 3
        %vm1837 = vcmp.lt.s32.totalorder %v1815, 4
        %v1838 = vsel %vm1834, %v1818, %v1821
        %v1839 = vsel %vm1837, %v1827, 2102212464
        %v1840 = vsel %vm1836, %v1824, %v1839
        %v1841 = vsel %vm1835, %v1838, %v1840
        %v1842 = vsel %vm1834, %v1821, %v1824
        %v1843 = vsel %vm1837, %v1830, 920167782
        %v1844 = vsel %vm1836, %v1827, %v1843
        %v1845 = vsel %vm1835, %v1842, %v1844
        %v1846 = vsel %vm1834, %v1824, %v1827
        %v1847 = vsel %vm1837, %v1833, 1326507024
        %v1848 = vsel %vm1836, %v1830, %v1847
        %v1849 = vsel %vm1835, %v1846, %v1848
        %v1850 = vshll.u32 %v1810, 8
        %v1851 = vand.u32 %v1850, 65535
        %v1852 = vshrl.u32 %v1850, 16
        %v1853 = vand.u32 %v1849, 65535
        %v1854 = vshrl.u32 %v1849, 16
        %v1855 = vmul.u32 %v1851, %v1853
        %v1856 = vmul.u32 %v1851, %v1854
        %v1857 = vmul.u32 %v1852, %v1853
        %v1858 = vmul.u32 %v1852, %v1854
        %v1859 = vshll.u32 %v1856, 16
        %v1860 = vshrl.u32 %v1856, 16
        %v1861 = vshll.u32 %v1857, 16
        %v1862 = vshrl.u32 %v1857, 16
        %vm1863 = vc.u32 %v1855, %v1859
        %v1864 = vsel %vm1863, 1, 0
        %v1865 = vadd.s32 %v1855, %v1859
        %v1866 = vadd.s32 %v1858, %v1864
        %vm1867 = vc.u32 %v1865, %v1861
        %v1868 = vsel %vm1867, 1, 0
        %v1869 = vadd.s32 %v1865, %v1861
        %v1870 = vadd.s32 %v1866, %v1868
        %v1871 = vadd.s32 %v1870, %v1860
        %v1872 = vadd.s32 %v1871, %v1862
        %v1873 = vand.u32 %v1850, 65535
        %v1874 = vshrl.u32 %v1850, 16
        %v1875 = vand.u32 %v1845, 65535
        %v1876 = vshrl.u32 %v1845, 16
        %v1877 = vmul.u32 %v1873, %v1875
        %v1878 = vmul.u32 %v1873, %v1876
        %v1879 = vmul.u32 %v1874, %v1875
        %v1880 = vmul.u32 %v1874, %v1876
        %v1881 = vshll.u32 %v1878, 16
        %v1882 = vshrl.u32 %v1878, 16
        %v1883 = vshll.u32 %v1879, 16
        %v1884 = vshrl.u32 %v1879, 16
        %vm1885 = vc.u32 %v1877, %v1881
        %v1886 = vsel %vm1885, 1, 0
        %v1887 = vadd.s32 %v1877, %v1881
        %v1888 = vadd.s32 %v1880, %v1886
        %vm1889 = vc.u32 %v1887, %v1883
        %v1890 = vsel %vm1889, 1, 0
        %v1891 = vadd.s32 %v1887, %v1883
        %v1892 = vadd.s32 %v1888, %v1890
        %v1893 = vadd.s32 %v1892, %v1882
        %v1894 = vadd.s32 %v1893, %v1884
        %v1895 = vmul.u32 %v1850, %v1841
        %v1896 = vadd.s32 %v1872, %v1891
        %vm1897 = vc.u32 %v1872, %v1891
        %v1898 = vadd.s32 %v1894, 1
        %v1899 = vsel %vm1897, %v1898, %v1894
        %v1900 = vadd.s32 %v1895, %v1899
        %v1901 = vadd.s32 %v1900, 536870912
        %v1902 = vshrl.u32 %v1901, 30
        %v1903 = vshll.u32 %v1902, 30
        %v1904 = vsub.s32 %v1900, %v1903
        %vm1905 = vcmp.lt.s32.totalorder %v1904, 0
        %v1906 = vsub.s32 0, %v1904
        %v1907 = vsel %vm1905, %v1906, %v1904
        %v1908 = vclz %v1907
        %v1909 = vsub.s32 %v1908, 2
        %vm1910 = vcmp.gt.s32.totalorder 0, %v1909
        %v1911 = vsel %vm1910, 0, %v1909
        %v1912 = vsub.s32 32, %v1911
        %v1913 = vshll.u32 %v1904, %v1911
        %v1914 = vshrl.u32 %v1896, %v1912
        %v1915 = vor.u32 %v1913, %v1914
        %v1916 = vsub.s32 4294967266, %v1911
        %v1917 = vadd.s32 %v1916, 127
        %v1918 = vshll.u32 %v1917, 23
        %v1919 = vor.u32 4788187, %v1918
        %v1920 = vand.u32 2147483647, %v1919
        %v1922 = vcvt.s32.f32 %v1915
        %v1923 = vmul.f32 %v1922, %v1920
        %v1924 = vxor.u32 %v1923, 2147483648
        %v1925 = vsel %vm1804, %v1924, %v1923
        %v1926 = vsub.s32 4, %v1902
        %v1927 = vsel %vm1804, %v1926, %v1902
        %v1928 = vsel %vm1803, %v1798, %v1925
        %v1929 = vsel %vm1803, 0, %v1927
        %v1930 = vmul.f32 %v1928, %v1928
        %v1931 = vmul.f32 %v1930, -0.001358992
        %v1932 = vadd.f32 %v1931, 0.041655596
        %v1933 = vmul.f32 %v1930, %v1932
        %v1934 = vadd.f32 %v1933, -0.4999988
        %v1935 = vmul.f32 %v1930, %v1934
        %v1936 = vadd.f32 1.0, %v1935
        %v1937 = vmul.f32 %v1928, %v1928
        %v1938 = vmul.f32 %v1937, -0.00019511016
        %v1939 = vadd.f32 %v1938, 0.008332121
        %v1940 = vmul.f32 %v1937, %v1939
        %v1941 = vadd.f32 %v1940, -0.16666654
        %v1942 = vmul.f32 %v1937, %v1941
        %v1943 = vadd.f32 %v1942, 1.0
        %v1944 = vmul.f32 %v1943, %v1928
        %vm1945 = vweird.f32 %v1798
        %v1946 = vadd.s32 %v1929, 3
        %v1947 = vand.u32 %v1946, 3
        %vm1948 = vcmp.lt.s32.totalorder %v1947, 2
        %vm1949 = vcmp.eq.s32.totalorder %v1947, 0
        %v1950 = vxor.u32 %v1944, 2147483648
        %v1951 = vsel %vm1949, %v1936, %v1950
        %vm1952 = vcmp.eq.s32.totalorder %v1947, 2
        %v1953 = vxor.u32 %v1936, 2147483648
        %v1954 = vsel %vm1952, %v1953, %v1944
        %v1955 = vsel %vm1948, %v1951, %v1954
        %v1956 = vsel %vm1945, nan, %v1955
        %v1957 = vand.u32 2147483647, %v1799
        %vm1958 = vcmp.le.f32.partialorder %v1957, 0.7853982
        %vm1959 = vcmp.lt.s32.totalorder %v1799, 0
        %v1960 = vand.u32 %v1799, 2139095040
        %v1961 = vshrl.u32 %v1960, 23
        %v1962 = vsub.s32 %v1961, 127
        %v1963 = vand.u32 2147483647, %v1799
        %v1964 = vand.u32 %v1963, 8388607
        %v1965 = vor.u32 %v1964, 8388608
        %v1966 = vsub.s32 0, %v1965
        %v1967 = vadd.s32 %v1962, 1
        %vm1968 = vcmp.gt.s32.totalorder %v1967, 0
        %v1969 = vsel %vm1968, %v1967, 0
        %v1970 = vshrl.u32 %v1969, 5
        %v1971 = vand.u32 %v1969, 31
        %v1972 = vsub.s32 32, %v1971
        %v1973 = vshrl.u32 683565275, %v1972
        %v1974 = vshll.u32 683565275, %v1971
        %v1975 = vshrl.u32 2475754826, %v1972
        %v1976 = vor.u32 %v1974, %v1975
        %v1977 = vshll.u32 2475754826, %v1971
        %v1978 = vshrl.u32 2131351028, %v1972
        %v1979 = vor.u32 %v1977, %v1978
        %v1980 = vshll.u32 2131351028, %v1971
        %v1981 = vshrl.u32 2102212464, %v1972
        %v1982 = vor.u32 %v1980, %v1981
        %v1983 = vshll.u32 2102212464, %v1971
        %v1984 = vshrl.u32 920167782, %v1972
        %v1985 = vor.u32 %v1983, %v1984
        %v1986 = vshll.u32 920167782, %v1971
        %v1987 = vshrl.u32 1326507024, %v1972
        %v1988 = vor.u32 %v1986, %v1987
        %vm1989 = vcmp.lt.s32.totalorder %v1970, 1
        %vm1990 = vcmp.lt.s32.totalorder %v1970, 2
        %vm1991 = vcmp.lt.s32.totalorder %v1970, 3
        %vm1992 = vcmp.lt.s32.totalorder %v1970, 4
        %v1993 = vsel %vm1989, %v1973, %v1976
        %v1994 = vsel %vm1992, %v1982, 2102212464
        %v1995 = vsel %vm1991, %v1979, %v1994
        %v1996 = vsel %vm1990, %v1993, %v1995
        %v1997 = vsel %vm1989, %v1976, %v1979
        %v1998 = vsel %vm1992, %v1985, 920167782
        %v1999 = vsel %vm1991, %v1982, %v1998
        %v2000 = vsel %vm1990, %v1997, %v1999
        %v2001 = vsel %vm1989, %v1979, %v1982
        %v2002 = vsel %vm1992, %v1988, 1326507024
        %v2003 = vsel %vm1991, %v1985, %v2002
        %v2004 = vsel %vm1990, %v2001, %v2003
        %v2005 = vshll.u32 %v1965, 8
        %v2006 = vand.u32 %v2005, 65535
        %v2007 = vshrl.u32 %v2005, 16
        %v2008 = vand.u32 %v2004, 65535
        %v2009 = vshrl.u32 %v2004, 16
        %v2010 = vmul.u32 %v2006, %v2008
        %v2011 = vmul.u32 %v2006, %v2009
        %v2012 = vmul.u32 %v2007, %v2008
        %v2013 = vmul.u32 %v2007, %v2009
        %v2014 = vshll.u32 %v2011, 16
        %v2015 = vshrl.u32 %v2011, 16
        %v2016 = vshll.u32 %v2012, 16
        %v2017 = vshrl.u32 %v2012, 16
        %vm2018 = vc.u32 %v2010, %v2014
        %v2019 = vsel %vm2018, 1, 0
        %v2020 = vadd.s32 %v2010, %v2014
        %v2021 = vadd.s32 %v2013, %v2019
        %vm2022 = vc.u32 %v2020, %v2016
        %v2023 = vsel %vm2022, 1, 0
        %v2024 = vadd.s32 %v2020, %v2016
        %v2025 = vadd.s32 %v2021, %v2023
        %v2026 = vadd.s32 %v2025, %v2015
        %v2027 = vadd.s32 %v2026, %v2017
        %v2028 = vand.u32 %v2005, 65535
        %v2029 = vshrl.u32 %v2005, 16
        %v2030 = vand.u32 %v2000, 65535
        %v2031 = vshrl.u32 %v2000, 16
        %v2032 = vmul.u32 %v2028, %v2030
        %v2033 = vmul.u32 %v2028, %v2031
        %v2034 = vmul.u32 %v2029, %v2030
        %v2035 = vmul.u32 %v2029, %v2031
        %v2036 = vshll.u32 %v2033, 16
        %v2037 = vshrl.u32 %v2033, 16
        %v2038 = vshll.u32 %v2034, 16
        %v2039 = vshrl.u32 %v2034, 16
        %vm2040 = vc.u32 %v2032, %v2036
        %v2041 = vsel %vm2040, 1, 0
        %v2042 = vadd.s32 %v2032, %v2036
        %v2043 = vadd.s32 %v2035, %v2041
        %vm2044 = vc.u32 %v2042, %v2038
        %v2045 = vsel %vm2044, 1, 0
        %v2046 = vadd.s32 %v2042, %v2038
        %v2047 = vadd.s32 %v2043, %v2045
        %v2048 = vadd.s32 %v2047, %v2037
        %v2049 = vadd.s32 %v2048, %v2039
        %v2050 = vmul.u32 %v2005, %v1996
        %v2051 = vadd.s32 %v2027, %v2046
        %vm2052 = vc.u32 %v2027, %v2046
        %v2053 = vadd.s32 %v2049, 1
        %v2054 = vsel %vm2052, %v2053, %v2049
        %v2055 = vadd.s32 %v2050, %v2054
        %v2056 = vadd.s32 %v2055, 536870912
        %v2057 = vshrl.u32 %v2056, 30
        %v2058 = vshll.u32 %v2057, 30
        %v2059 = vsub.s32 %v2055, %v2058
        %vm2060 = vcmp.lt.s32.totalorder %v2059, 0
        %v2061 = vsub.s32 0, %v2059
        %v2062 = vsel %vm2060, %v2061, %v2059
        %v2063 = vclz %v2062
        %v2064 = vsub.s32 %v2063, 2
        %vm2065 = vcmp.gt.s32.totalorder 0, %v2064
        %v2066 = vsel %vm2065, 0, %v2064
        %v2067 = vsub.s32 32, %v2066
        %v2068 = vshll.u32 %v2059, %v2066
        %v2069 = vshrl.u32 %v2051, %v2067
        %v2070 = vor.u32 %v2068, %v2069
        %v2071 = vsub.s32 4294967266, %v2066
        %v2072 = vadd.s32 %v2071, 127
        %v2073 = vshll.u32 %v2072, 23
        %v2074 = vor.u32 4788187, %v2073
        %v2075 = vand.u32 2147483647, %v2074
        %v2077 = vcvt.s32.f32 %v2070
        %v2078 = vmul.f32 %v2077, %v2075
        %v2079 = vxor.u32 %v2078, 2147483648
        %v2080 = vsel %vm1959, %v2079, %v2078
        %v2081 = vsub.s32 4, %v2057
        %v2082 = vsel %vm1959, %v2081, %v2057
        %v2083 = vsel %vm1958, %v1799, %v2080
        %v2084 = vsel %vm1958, 0, %v2082
        %v2085 = vmul.f32 %v2083, %v2083
        %v2086 = vmul.f32 %v2085, -0.001358992
        %v2087 = vadd.f32 %v2086, 0.041655596
        %v2088 = vmul.f32 %v2085, %v2087
        %v2089 = vadd.f32 %v2088, -0.4999988
        %v2090 = vmul.f32 %v2085, %v2089
        %v2091 = vadd.f32 1.0, %v2090
        %v2092 = vmul.f32 %v2083, %v2083
        %v2093 = vmul.f32 %v2092, -0.00019511016
        %v2094 = vadd.f32 %v2093, 0.008332121
        %v2095 = vmul.f32 %v2092, %v2094
        %v2096 = vadd.f32 %v2095, -0.16666654
        %v2097 = vmul.f32 %v2092, %v2096
        %v2098 = vadd.f32 %v2097, 1.0
        %v2099 = vmul.f32 %v2098, %v2083
        %vm2100 = vweird.f32 %v1799
        %v2101 = vadd.s32 %v2084, 3
        %v2102 = vand.u32 %v2101, 3
        %vm2103 = vcmp.lt.s32.totalorder %v2102, 2
        %vm2104 = vcmp.eq.s32.totalorder %v2102, 0
        %v2105 = vxor.u32 %v2099, 2147483648
        %v2106 = vsel %vm2104, %v2091, %v2105
        %vm2107 = vcmp.eq.s32.totalorder %v2102, 2
        %v2108 = vxor.u32 %v2091, 2147483648
        %v2109 = vsel %vm2107, %v2108, %v2099
        %v2110 = vsel %vm2103, %v2106, %v2109
        %v2111 = vsel %vm2100, nan, %v2110
        %v2112 = vand.u32 2147483647, %v1800
        %vm2113 = vcmp.le.f32.partialorder %v2112, 0.7853982
        %vm2114 = vcmp.lt.s32.totalorder %v1800, 0
        %v2115 = vand.u32 %v1800, 2139095040
        %v2116 = vshrl.u32 %v2115, 23
        %v2117 = vsub.s32 %v2116, 127
        %v2118 = vand.u32 2147483647, %v1800
        %v2119 = vand.u32 %v2118, 8388607
        %v2120 = vor.u32 %v2119, 8388608
        %v2121 = vsub.s32 0, %v2120
        %v2122 = vadd.s32 %v2117, 1
        %vm2123 = vcmp.gt.s32.totalorder %v2122, 0
        %v2124 = vsel %vm2123, %v2122, 0
        %v2125 = vshrl.u32 %v2124, 5
        %v2126 = vand.u32 %v2124, 31
        %v2127 = vsub.s32 32, %v2126
        %v2128 = vshrl.u32 683565275, %v2127
        %v2129 = vshll.u32 683565275, %v2126
        %v2130 = vshrl.u32 2475754826, %v2127
        %v2131 = vor.u32 %v2129, %v2130
        %v2132 = vshll.u32 2475754826, %v2126
        %v2133 = vshrl.u32 2131351028, %v2127
        %v2134 = vor.u32 %v2132, %v2133
        %v2135 = vshll.u32 2131351028, %v2126
        %v2136 = vshrl.u32 2102212464, %v2127
        %v2137 = vor.u32 %v2135, %v2136
        %v2138 = vshll.u32 2102212464, %v2126
        %v2139 = vshrl.u32 920167782, %v2127
        %v2140 = vor.u32 %v2138, %v2139
        %v2141 = vshll.u32 920167782, %v2126
        %v2142 = vshrl.u32 1326507024, %v2127
        %v2143 = vor.u32 %v2141, %v2142
        %vm2144 = vcmp.lt.s32.totalorder %v2125, 1
        %vm2145 = vcmp.lt.s32.totalorder %v2125, 2
        %vm2146 = vcmp.lt.s32.totalorder %v2125, 3
        %vm2147 = vcmp.lt.s32.totalorder %v2125, 4
        %v2148 = vsel %vm2144, %v2128, %v2131
        %v2149 = vsel %vm2147, %v2137, 2102212464
        %v2150 = vsel %vm2146, %v2134, %v2149
        %v2151 = vsel %vm2145, %v2148, %v2150
        %v2152 = vsel %vm2144, %v2131, %v2134
        %v2153 = vsel %vm2147, %v2140, 920167782
        %v2154 = vsel %vm2146, %v2137, %v2153
        %v2155 = vsel %vm2145, %v2152, %v2154
        %v2156 = vsel %vm2144, %v2134, %v2137
        %v2157 = vsel %vm2147, %v2143, 1326507024
        %v2158 = vsel %vm2146, %v2140, %v2157
        %v2159 = vsel %vm2145, %v2156, %v2158
        %v2160 = vshll.u32 %v2120, 8
        %v2161 = vand.u32 %v2160, 65535
        %v2162 = vshrl.u32 %v2160, 16
        %v2163 = vand.u32 %v2159, 65535
        %v2164 = vshrl.u32 %v2159, 16
        %v2165 = vmul.u32 %v2161, %v2163
        %v2166 = vmul.u32 %v2161, %v2164
        %v2167 = vmul.u32 %v2162, %v2163
        %v2168 = vmul.u32 %v2162, %v2164
        %v2169 = vshll.u32 %v2166, 16
        %v2170 = vshrl.u32 %v2166, 16
        %v2171 = vshll.u32 %v2167, 16
        %v2172 = vshrl.u32 %v2167, 16
        %vm2173 = vc.u32 %v2165, %v2169
        %v2174 = vsel %vm2173, 1, 0
        %v2175 = vadd.s32 %v2165, %v2169
        %v2176 = vadd.s32 %v2168, %v2174
        %vm2177 = vc.u32 %v2175, %v2171
        %v2178 = vsel %vm2177, 1, 0
        %v2179 = vadd.s32 %v2175, %v2171
        %v2180 = vadd.s32 %v2176, %v2178
        %v2181 = vadd.s32 %v2180, %v2170
        %v2182 = vadd.s32 %v2181, %v2172
        %v2183 = vand.u32 %v2160, 65535
        %v2184 = vshrl.u32 %v2160, 16
        %v2185 = vand.u32 %v2155, 65535
        %v2186 = vshrl.u32 %v2155, 16
        %v2187 = vmul.u32 %v2183, %v2185
        %v2188 = vmul.u32 %v2183, %v2186
        %v2189 = vmul.u32 %v2184, %v2185
        %v2190 = vmul.u32 %v2184, %v2186
        %v2191 = vshll.u32 %v2188, 16
        %v2192 = vshrl.u32 %v2188, 16
        %v2193 = vshll.u32 %v2189, 16
        %v2194 = vshrl.u32 %v2189, 16
        %vm2195 = vc.u32 %v2187, %v2191
        %v2196 = vsel %vm2195, 1, 0
        %v2197 = vadd.s32 %v2187, %v2191
        %v2198 = vadd.s32 %v2190, %v2196
        %vm2199 = vc.u32 %v2197, %v2193
        %v2200 = vsel %vm2199, 1, 0
        %v2201 = vadd.s32 %v2197, %v2193
        %v2202 = vadd.s32 %v2198, %v2200
        %v2203 = vadd.s32 %v2202, %v2192
        %v2204 = vadd.s32 %v2203, %v2194
        %v2205 = vmul.u32 %v2160, %v2151
        %v2206 = vadd.s32 %v2182, %v2201
        %vm2207 = vc.u32 %v2182, %v2201
        %v2208 = vadd.s32 %v2204, 1
        %v2209 = vsel %vm2207, %v2208, %v2204
        %v2210 = vadd.s32 %v2205, %v2209
        %v2211 = vadd.s32 %v2210, 536870912
        %v2212 = vshrl.u32 %v2211, 30
        %v2213 = vshll.u32 %v2212, 30
        %v2214 = vsub.s32 %v2210, %v2213
        %vm2215 = vcmp.lt.s32.totalorder %v2214, 0
        %v2216 = vsub.s32 0, %v2214
        %v2217 = vsel %vm2215, %v2216, %v2214
        %v2218 = vclz %v2217
        %v2219 = vsub.s32 %v2218, 2
        %vm2220 = vcmp.gt.s32.totalorder 0, %v2219
        %v2221 = vsel %vm2220, 0, %v2219
        %v2222 = vsub.s32 32, %v2221
        %v2223 = vshll.u32 %v2214, %v2221
        %v2224 = vshrl.u32 %v2206, %v2222
        %v2225 = vor.u32 %v2223, %v2224
        %v2226 = vsub.s32 4294967266, %v2221
        %v2227 = vadd.s32 %v2226, 127
        %v2228 = vshll.u32 %v2227, 23
        %v2229 = vor.u32 4788187, %v2228
        %v2230 = vand.u32 2147483647, %v2229
        %v2232 = vcvt.s32.f32 %v2225
        %v2233 = vmul.f32 %v2232, %v2230
        %v2234 = vxor.u32 %v2233, 2147483648
        %v2235 = vsel %vm2114, %v2234, %v2233
        %v2236 = vsub.s32 4, %v2212
        %v2237 = vsel %vm2114, %v2236, %v2212
        %v2238 = vsel %vm2113, %v1800, %v2235
        %v2239 = vsel %vm2113, 0, %v2237
        %v2240 = vmul.f32 %v2238, %v2238
        %v2241 = vmul.f32 %v2240, -0.001358992
        %v2242 = vadd.f32 %v2241, 0.041655596
        %v2243 = vmul.f32 %v2240, %v2242
        %v2244 = vadd.f32 %v2243, -0.4999988
        %v2245 = vmul.f32 %v2240, %v2244
        %v2246 = vadd.f32 1.0, %v2245
        %v2247 = vmul.f32 %v2238, %v2238
        %v2248 = vmul.f32 %v2247, -0.00019511016
        %v2249 = vadd.f32 %v2248, 0.008332121
        %v2250 = vmul.f32 %v2247, %v2249
        %v2251 = vadd.f32 %v2250, -0.16666654
        %v2252 = vmul.f32 %v2247, %v2251
        %v2253 = vadd.f32 %v2252, 1.0
        %v2254 = vmul.f32 %v2253, %v2238
        %vm2255 = vweird.f32 %v1800
        %v2256 = vadd.s32 %v2239, 3
        %v2257 = vand.u32 %v2256, 3
        %vm2258 = vcmp.lt.s32.totalorder %v2257, 2
        %vm2259 = vcmp.eq.s32.totalorder %v2257, 0
        %v2260 = vxor.u32 %v2254, 2147483648
        %v2261 = vsel %vm2259, %v2246, %v2260
        %vm2262 = vcmp.eq.s32.totalorder %v2257, 2
        %v2263 = vxor.u32 %v2246, 2147483648
        %v2264 = vsel %vm2262, %v2263, %v2254
        %v2265 = vsel %vm2258, %v2261, %v2264
        %v2266 = vsel %vm2255, nan, %v2265
        %v2267 = vand.u32 2147483647, %v1801
        %vm2268 = vcmp.le.f32.partialorder %v2267, 0.7853982
        %vm2269 = vcmp.lt.s32.totalorder %v1801, 0
        %v2270 = vand.u32 %v1801, 2139095040
        %v2271 = vshrl.u32 %v2270, 23
        %v2272 = vsub.s32 %v2271, 127
        %v2273 = vand.u32 2147483647, %v1801
        %v2274 = vand.u32 %v2273, 8388607
        %v2275 = vor.u32 %v2274, 8388608
        %v2276 = vsub.s32 0, %v2275
        %v2277 = vadd.s32 %v2272, 1
        %vm2278 = vcmp.gt.s32.totalorder %v2277, 0
        %v2279 = vsel %vm2278, %v2277, 0
        %v2280 = vshrl.u32 %v2279, 5
        %v2281 = vand.u32 %v2279, 31
        %v2282 = vsub.s32 32, %v2281
        %v2283 = vshrl.u32 683565275, %v2282
        %v2284 = vshll.u32 683565275, %v2281
        %v2285 = vshrl.u32 2475754826, %v2282
        %v2286 = vor.u32 %v2284, %v2285
        %v2287 = vshll.u32 2475754826, %v2281
        %v2288 = vshrl.u32 2131351028, %v2282
        %v2289 = vor.u32 %v2287, %v2288
        %v2290 = vshll.u32 2131351028, %v2281
        %v2291 = vshrl.u32 2102212464, %v2282
        %v2292 = vor.u32 %v2290, %v2291
        %v2293 = vshll.u32 2102212464, %v2281
        %v2294 = vshrl.u32 920167782, %v2282
        %v2295 = vor.u32 %v2293, %v2294
        %v2296 = vshll.u32 920167782, %v2281
        %v2297 = vshrl.u32 1326507024, %v2282
        %v2298 = vor.u32 %v2296, %v2297
        %vm2299 = vcmp.lt.s32.totalorder %v2280, 1
        %vm2300 = vcmp.lt.s32.totalorder %v2280, 2
        %vm2301 = vcmp.lt.s32.totalorder %v2280, 3
        %vm2302 = vcmp.lt.s32.totalorder %v2280, 4
        %v2303 = vsel %vm2299, %v2283, %v2286
        %v2304 = vsel %vm2302, %v2292, 2102212464
        %v2305 = vsel %vm2301, %v2289, %v2304
        %v2306 = vsel %vm2300, %v2303, %v2305
        %v2307 = vsel %vm2299, %v2286, %v2289
        %v2308 = vsel %vm2302, %v2295, 920167782
        %v2309 = vsel %vm2301, %v2292, %v2308
        %v2310 = vsel %vm2300, %v2307, %v2309
        %v2311 = vsel %vm2299, %v2289, %v2292
        %v2312 = vsel %vm2302, %v2298, 1326507024
        %v2313 = vsel %vm2301, %v2295, %v2312
        %v2314 = vsel %vm2300, %v2311, %v2313
        %v2315 = vshll.u32 %v2275, 8
        %v2316 = vand.u32 %v2315, 65535
        %v2317 = vshrl.u32 %v2315, 16
        %v2318 = vand.u32 %v2314, 65535
        %v2319 = vshrl.u32 %v2314, 16
        %v2320 = vmul.u32 %v2316, %v2318
        %v2321 = vmul.u32 %v2316, %v2319
        %v2322 = vmul.u32 %v2317, %v2318
        %v2323 = vmul.u32 %v2317, %v2319
        %v2324 = vshll.u32 %v2321, 16
        %v2325 = vshrl.u32 %v2321, 16
        %v2326 = vshll.u32 %v2322, 16
        %v2327 = vshrl.u32 %v2322, 16
        %vm2328 = vc.u32 %v2320, %v2324
        %v2329 = vsel %vm2328, 1, 0
        %v2330 = vadd.s32 %v2320, %v2324
        %v2331 = vadd.s32 %v2323, %v2329
        %vm2332 = vc.u32 %v2330, %v2326
        %v2333 = vsel %vm2332, 1, 0
        %v2334 = vadd.s32 %v2330, %v2326
        %v2335 = vadd.s32 %v2331, %v2333
        %v2336 = vadd.s32 %v2335, %v2325
        %v2337 = vadd.s32 %v2336, %v2327
        %v2338 = vand.u32 %v2315, 65535
        %v2339 = vshrl.u32 %v2315, 16
        %v2340 = vand.u32 %v2310, 65535
        %v2341 = vshrl.u32 %v2310, 16
        %v2342 = vmul.u32 %v2338, %v2340
        %v2343 = vmul.u32 %v2338, %v2341
        %v2344 = vmul.u32 %v2339, %v2340
        %v2345 = vmul.u32 %v2339, %v2341
        %v2346 = vshll.u32 %v2343, 16
        %v2347 = vshrl.u32 %v2343, 16
        %v2348 = vshll.u32 %v2344, 16
        %v2349 = vshrl.u32 %v2344, 16
        %vm2350 = vc.u32 %v2342, %v2346
        %v2351 = vsel %vm2350, 1, 0
        %v2352 = vadd.s32 %v2342, %v2346
        %v2353 = vadd.s32 %v2345, %v2351
        %vm2354 = vc.u32 %v2352, %v2348
        %v2355 = vsel %vm2354, 1, 0
        %v2356 = vadd.s32 %v2352, %v2348
        %v2357 = vadd.s32 %v2353, %v2355
        %v2358 = vadd.s32 %v2357, %v2347
        %v2359 = vadd.s32 %v2358, %v2349
        %v2360 = vmul.u32 %v2315, %v2306
        %v2361 = vadd.s32 %v2337, %v2356
        %vm2362 = vc.u32 %v2337, %v2356
        %v2363 = vadd.s32 %v2359, 1
        %v2364 = vsel %vm2362, %v2363, %v2359
        %v2365 = vadd.s32 %v2360, %v2364
        %v2366 = vadd.s32 %v2365, 536870912
        %v2367 = vshrl.u32 %v2366, 30
        %v2368 = vshll.u32 %v2367, 30
        %v2369 = vsub.s32 %v2365, %v2368
        %vm2370 = vcmp.lt.s32.totalorder %v2369, 0
        %v2371 = vsub.s32 0, %v2369
        %v2372 = vsel %vm2370, %v2371, %v2369
        %v2373 = vclz %v2372
        %v2374 = vsub.s32 %v2373, 2
        %vm2375 = vcmp.gt.s32.totalorder 0, %v2374
        %v2376 = vsel %vm2375, 0, %v2374
        %v2377 = vsub.s32 32, %v2376
        %v2378 = vshll.u32 %v2369, %v2376
        %v2379 = vshrl.u32 %v2361, %v2377
        %v2380 = vor.u32 %v2378, %v2379
        %v2381 = vsub.s32 4294967266, %v2376
        %v2382 = vadd.s32 %v2381, 127
        %v2383 = vshll.u32 %v2382, 23
        %v2384 = vor.u32 4788187, %v2383
        %v2385 = vand.u32 2147483647, %v2384
        %v2387 = vcvt.s32.f32 %v2380
        %v2388 = vmul.f32 %v2387, %v2385
        %v2389 = vxor.u32 %v2388, 2147483648
        %v2390 = vsel %vm2269, %v2389, %v2388
        %v2391 = vsub.s32 4, %v2367
        %v2392 = vsel %vm2269, %v2391, %v2367
        %v2393 = vsel %vm2268, %v1801, %v2390
        %v2394 = vsel %vm2268, 0, %v2392
        %v2395 = vmul.f32 %v2393, %v2393
        %v2396 = vmul.f32 %v2395, -0.001358992
        %v2397 = vadd.f32 %v2396, 0.041655596
        %v2398 = vmul.f32 %v2395, %v2397
        %v2399 = vadd.f32 %v2398, -0.4999988
        %v2400 = vmul.f32 %v2395, %v2399
        %v2401 = vadd.f32 1.0, %v2400
        %v2402 = vmul.f32 %v2393, %v2393
        %v2403 = vmul.f32 %v2402, -0.00019511016
        %v2404 = vadd.f32 %v2403, 0.008332121
        %v2405 = vmul.f32 %v2402, %v2404
        %v2406 = vadd.f32 %v2405, -0.16666654
        %v2407 = vmul.f32 %v2402, %v2406
        %v2408 = vadd.f32 %v2407, 1.0
        %v2409 = vmul.f32 %v2408, %v2393
        %vm2410 = vweird.f32 %v1801
        %v2411 = vadd.s32 %v2394, 3
        %v2412 = vand.u32 %v2411, 3
        %vm2413 = vcmp.lt.s32.totalorder %v2412, 2
        %vm2414 = vcmp.eq.s32.totalorder %v2412, 0
        %v2415 = vxor.u32 %v2409, 2147483648
        %v2416 = vsel %vm2414, %v2401, %v2415
        %vm2417 = vcmp.eq.s32.totalorder %v2412, 2
        %v2418 = vxor.u32 %v2401, 2147483648
        %v2419 = vsel %vm2417, %v2418, %v2409
        %v2420 = vsel %vm2413, %v2416, %v2419
        %v2421 = vsel %vm2410, nan, %v2420
        %v2422 = vld [vmem:[%s7] sm:$0xff]
        %v2423 = vld [vmem:[%s7 + $0x8] sm:$0xff]
        %v2424 = vld [vmem:[%s7 + $0x10] sm:$0xff]
        %v2425 = vld [vmem:[%s7 + $0x18] sm:$0xff]
        %v2426 = vld [vmem:[%s8] sm:$0xff]
        %v2427 = vld [vmem:[%s8 + $0x8] sm:$0xff]
        %v2428 = vld [vmem:[%s8 + $0x10] sm:$0xff]
        %v2429 = vld [vmem:[%s8 + $0x18] sm:$0xff]
        %2431 = vset.pattern.permute.xlu0 0
        %2432 = vperm.xlu0 %2431, %v2426
        %v2433 = vpop.permute.xlu0 %2432
        %2436 = vset.pattern.permute.xlu0 0
        %2437 = vperm.xlu0 %2436, %v2427
        %v2438 = vpop.permute.xlu0 %2437
        %2441 = vset.pattern.permute.xlu0 0
        %2442 = vperm.xlu0 %2441, %v2428
        %v2443 = vpop.permute.xlu0 %2442
        %2446 = vset.pattern.permute.xlu0 0
        %2447 = vperm.xlu0 %2446, %v2429
        %v2448 = vpop.permute.xlu0 %2447
        %v2451 = vsel %vm1063, %v2422, 0
        %v2454 = vsel %vm1063, %v2423, 0
        %v2457 = vsel %vm1063, %v2424, 0
        %v2460 = vsel %vm1063, %v2425, 0
        %2462 = vmatpush.msra.mxu0 0.0
        %2463 = vmatpush.msra.mxu0 0.0
        %2464 = vmatpush.msra.mxu0 0.0
        %2465 = vmatpush.msra.mxu0 0.0
        %2466 = vmatpush.msra.mxu0 0.0
        %2467 = vmatpush.msra.mxu0 0.0
        %2468 = vmatpush.msra.mxu0 0.0
        %2469 = vmatpush.msra.mxu0 0.0
        %2470 = vmatpush.msra.mxu0 0.0
        %2471 = vmatpush.msra.mxu0 0.0
        %2472 = vmatpush.msra.mxu0 0.0
        %2473 = vmatpush.msra.mxu0 0.0
        %2474 = vmatpush.msra.mxu0 %v2421
        %2475 = vmatpush.msra.mxu0 %v2266
        %2476 = vmatpush.msra.mxu0 %v2111
        %2477 = vmatpush.msra.mxu0 %v1956
        %2478 = vmatmul.f32.gmra.mxu0 %v2451
        %v2479 = vpop.f32.mrf.mxu0
        %v2480 = vadd.f32 %v2433, %v2479
        %2481 = vmatmul.f32.gmra.mxu0 %v2454
        %v2482 = vpop.f32.mrf.mxu0
        %v2483 = vadd.f32 %v2438, %v2482
        %2484 = vmatmul.f32.gmra.mxu0 %v2457
        %v2485 = vpop.f32.mrf.mxu0
        %v2486 = vadd.f32 %v2443, %v2485
        %2487 = vmatmul.f32.gmra.mxu0 %v2460
        %v2488 = vpop.f32.mrf.mxu0
        %v2489 = vadd.f32 %v2448, %v2488
        %2490 = vdwg.mxu0
        %2491 = vst [vmem:[%s323] sm:$0xff] %v2480
        %2492 = vst [vmem:[%s323 + $0x8] sm:$0xff] %v2483
        %2493 = vst [vmem:[%s323 + $0x10] sm:$0xff] %v2486
        %2494 = vst [vmem:[%s323 + $0x18] sm:$0xff] %v2489
        %s2495 = sand.u32 %s225, 1
        %s2496 = scalar_lea.sflag [#allocation3], %s2495
        %s2497 = sand.u32 %s225, 1
        %s2498 = smul.addr %s2497, 32
        %s2499 = scalar_lea.vmem [#allocation2], %s2498
        // Predicated region
        $region57: #{tpu_custom_call.1} parent=55 // pred_check
          %p2500 = pneg %p235
        $region58: #{tpu_custom_call.1} parent=55 // pred_check_branch
          %2502 = sbr.rel (%p2500) target = $region60
        $region59: #{tpu_custom_call.1} parent=55 // pred_region
          %2504 = vsyncadd %s2496, 0
          %s2505 = smul.addr %s23, 8
          %s2506 = scalar_lea.hbm %s9, %s2505
          %s2507 = sshll.u32 %s2499, 4
          %s2508 = int_to_ptr.vmem [resolvable:$true] %s2507
          %s2509 = sshll.u32 %s2506, 4
          %s2510 = int_to_ptr.hbm [resolvable:$true] %s2509
          %2515 = dma.vmem_to_hbm [thread:$0]  %s2508, 512, %s2510, %s2496, 128, 256, 8
        $region60: #{tpu_custom_call.1} parent=55 // pred_fallthru
          _
      $region56: #{tpu_custom_call.1} parent=5 // pred_fallthru
        _
      %p2516 = scmp.le.s32.totalorder 2, %s18
      // Predicated region
      $region61: #{tpu_custom_call.1} parent=5 // pred_check
        %p2517 = pneg %p2516
      $region62: #{tpu_custom_call.1} parent=5 // pred_check_branch
        %2519 = sbr.rel (%p2517) target = $region64
      $region63: #{tpu_custom_call.1} parent=5 // pred_region
        %s2520 = ssub.s32 %s18, 2
        // Predicated region
        $region65: #{tpu_custom_call.1} parent=63 // pred_check
          %p2521 = pneg %p241
        $region66: #{tpu_custom_call.1} parent=63 // pred_check_branch
          %2523 = sbr.rel (%p2521) target = $region68
        $region67: #{tpu_custom_call.1} parent=63 // pred_region
          %s2524 = sand.u32 %s226, 1
          %s2525 = scalar_lea.sflag [#allocation3], %s2524
          %s2526 = sand.u32 %s226, 1
          %s2527 = smul.addr %s2526, 32
          %s2528 = scalar_lea.vmem [#allocation2], %s2527
          %2530 = dma.done %s2525, 512
        $region68: #{tpu_custom_call.1} parent=63 // pred_fallthru
          _
      $region64: #{tpu_custom_call.1} parent=5 // pred_fallthru
        _
    $region6: #{tpu_custom_call.1} parent=1 // loop_footer
      %s22 = sadd.s32 1, %s18
    $region7: #{tpu_custom_call.1} parent=1 // loop_footer_branch
      %17 = sbr.rel target = $region3
    $region8: #{tpu_custom_call.1} parent=1 // loop_exit
      _
    %2531 = vsyncpa [#allocation3], 1
    %s2532 = scalar_lea.sflag [#allocation3], 1
    %2533 = vsyncpa %s2532, 1

</llo_original>
